<compile_context>
chip_gen: v6e
topology: v6e:2x2x1
jax: 0.10.0
libtpu: 0.0.40
codegen_flags: <defaults>
</compile_context>

<pallas_src>
import functools

import jax
import jax.numpy as jnp
from jax.experimental import pallas as pl
from jax.experimental.pallas import tpu as pltpu
from jax.scipy.special import gammaln


_HALF_LOG_TWO_PI = 0.9189385332046727


def _lgamma_pos(z):
    """log(Gamma(z)) for z > 0 via shift-by-8 + Stirling series.

    For z < 8:  lgamma(z) = lgamma(z + 8) - log(z (z+1) ... (z+7)); the product is
    evaluated on min(z, 8) so it can never overflow (the value is discarded when
    z >= 8).  lgamma at an argument >= 8 uses the Stirling series with three
    correction terms (truncation error ~3e-10, far below f32 resolution).
    Cost: 2 EUP logs + 1 approximate EUP reciprocal per call, vs. 8 full divides +
    2 logs for the unrolled Lanczos series this replaces.
    """
    small = z < 8.0
    zc = jnp.minimum(z, 8.0)                 # clamp so the shift product cannot overflow
    prod = zc
    for k in range(1, 8):
        prod = prod * (zc + float(k))
    corr = jnp.where(small, jnp.log(prod), 0.0)
    zs = jnp.where(small, z + 8.0, z)        # zs >= 8 always
    r = pl.reciprocal(zs, approx=True)       # Stirling tail only -> approx is plenty
    r2 = r * r
    tail = r * (1.0 / 12.0 + r2 * (-1.0 / 360.0 + r2 * (1.0 / 1260.0)))
    return (zs - 0.5) * jnp.log(zs) - zs + _HALF_LOG_TWO_PI + tail - corr


def _fold_rows_to_sublanes(tile):
    """(tb, tc) -> (8, tc) by summing sublane-aligned row groups (pure VALU adds)."""
    acc = tile[0:8, :]
    for g in range(1, tile.shape[0] // 8):
        acc = acc + tile[g * 8:(g + 1) * 8, :]
    return acc


def _zinb_loss_kernel(x_ref, mean_ref, disp_ref, pi_ref,
                      res_sum_ref, pisq_sum_ref,
                      *, eps, scale_factor, n_rows, tile_rows, needs_row_mask):
    i = pl.program_id(1)                     # batch-tile index (reduction axis, last)

    @pl.when(i == 0)
    def _init():
        res_sum_ref[...] = jnp.zeros_like(res_sum_ref)
        pisq_sum_ref[...] = jnp.zeros_like(pisq_sum_ref)

    x = x_ref[...].astype(jnp.float32)
    mean = mean_ref[...].astype(jnp.float32) * scale_factor
    disp = disp_ref[...].astype(jnp.float32)
    pi = pi_ref[...].astype(jnp.float32)

    nb_case = (
        _lgamma_pos(disp + eps)
        + _lgamma_pos(x + 1.0)
        - _lgamma_pos(x + disp + eps)
        - disp * jnp.log(disp + eps)
        - x * jnp.log(mean + eps)
        + (disp + x) * jnp.log(disp + mean + eps)
    )
    # where() selects (does not blend), so inf/NaN in the unselected branch is benign.
    zero_case = -jnp.log(pi + (1.0 - pi) * jnp.exp(-nb_case) + eps)
    result = jnp.where(x < 1e-8, zero_case, -jnp.log(1.0 - pi + eps) + nb_case)
    pisq = pi * pi

    def _accumulate(res_tile, pisq_tile):
        res_sum_ref[...] += _fold_rows_to_sublanes(res_tile)
        pisq_sum_ref[...] += _fold_rows_to_sublanes(pisq_tile)

    if needs_row_mask:
        last = pl.num_programs(1) - 1

        @pl.when(i < last)
        def _fast():                          # all full tiles: no mask at all
            _accumulate(result, pisq)

        @pl.when(i == last)
        def _masked():                        # only the ragged last batch tile
            row = i * tile_rows + jax.lax.broadcasted_iota(jnp.int32, (tile_rows, 1), 0)
            valid = row < n_rows
            _accumulate(jnp.where(valid, result, 0.0), jnp.where(valid, pisq, 0.0))
    else:
        _accumulate(result, pisq)


def _round_up(n, m):
    return ((n + m - 1) // m) * m


@functools.partial(
    jax.jit,
    static_argnames=("scale_factor", "ridge_lambda", "tile_rows", "tile_cols"),
)
def zinb_loss(x, mean, dispersion, pi, *, scale_factor=1.0, ridge_lambda=0.0,
              tile_rows=256, tile_cols=512):
    """ZINBLoss.forward: result.mean() + ridge_lambda * sum(pi**2)."""
    B, D = x.shape

    # Keep blocks lane-dense: pad the feature axis to a multiple of 128 instead of
    # falling back to full-width (tc = D) blocks.  Padded columns are sliced off
    # before the final sums, so their (finite) garbage never contributes.
    Dp = _round_up(D, 128)
    if Dp != D:
        pad = ((0, 0), (0, Dp - D))
        x = jnp.pad(x, pad)
        mean = jnp.pad(mean, pad)
        dispersion = jnp.pad(dispersion, pad)
        pi = jnp.pad(pi, pad)

    tb = max(8, min(_round_up(int(tile_rows), 8), _round_up(B, 8)))
    tc = max(128, (min(int(tile_cols), Dp) // 128) * 128)
    # v7x megacore: make sure the parallel feature axis has >= 2 tiles so both
    # TensorCores get work (harmless on 1-TC v5e/v6e).
    if pl.cdiv(Dp, tc) < 2 and Dp >= 256:
        tc = _round_up(Dp // 2, 128)
    n_col_tiles = pl.cdiv(Dp, tc)
    n_row_tiles = pl.cdiv(B, tb)

    kernel = functools.partial(
        _zinb_loss_kernel,
        eps=1e-10,
        scale_factor=float(scale_factor),
        n_rows=B,
        tile_rows=tb,
        needs_row_mask=(B % tb != 0),
    )

    in_spec = pl.BlockSpec((tb, tc), lambda j, i: (i, j))
    acc_spec = pl.BlockSpec((8, tc), lambda j, i: (0, j))

    res_part, pisq_part = pl.pallas_call(
        kernel,
        out_shape=(
            jax.ShapeDtypeStruct((8, Dp), jnp.float32),
            jax.ShapeDtypeStruct((8, Dp), jnp.float32),
        ),
        grid_spec=pltpu.PrefetchScalarGridSpec(
            num_scalar_prefetch=0,
            grid=(n_col_tiles, n_row_tiles),   # reduction (batch) axis last
            in_specs=[in_spec, in_spec, in_spec, in_spec],
            out_specs=[acc_spec, acc_spec],
        ),
        compiler_params=pltpu.CompilerParams(
            dimension_semantics=("parallel", "arbitrary"),
        ),
    )(x, mean, dispersion, pi)

    if Dp != D:
        res_part = res_part[:, :D]
        pisq_part = pisq_part[:, :D]
    return jnp.sum(res_part) / float(B * D) + float(ridge_lambda) * jnp.sum(pisq_part)


def zinb_loss_ref(x, mean, dispersion, pi, scale_factor=1.0, ridge_lambda=0.0):
    """Pure-JAX reference matching the PyTorch module."""
    eps = 1e-10
    mean = mean * scale_factor
    nb_case = (
        gammaln(dispersion + eps) + gammaln(x + 1.0) - gammaln(x + dispersion + eps)
        - dispersion * jnp.log(dispersion + eps)
        - x * jnp.log(mean + eps)
        + (dispersion + x) * jnp.log(dispersion + mean + eps)
    )
    zero_case = -jnp.log(pi + (1.0 - pi) * jnp.exp(-nb_case) + eps)
    result = jnp.where(x < 1e-8, zero_case, -jnp.log(1.0 - pi + eps) + nb_case)
    return jnp.mean(result) + ridge_lambda * jnp.sum(pi ** 2)


if __name__ == "__main__":
    key = jax.random.PRNGKey(0)
    kx, km, kd, kp = jax.random.split(key, 4)

    # Case A: lane-dense D; B=100 vs 32-row tiles exercises the ragged last-tile mask,
    # Poisson counts include zeros which exercise the zero-inflation branch.
    B, D = 100, 512
    x = jax.random.poisson(kx, 1.5, (B, D)).astype(jnp.float32)
    mean = jax.random.uniform(km, (B, D), jnp.float32, minval=0.05, maxval=6.0)
    dispersion = jax.random.uniform(kd, (B, D), jnp.float32, minval=0.1, maxval=2.0)
    pi = jax.random.uniform(kp, (B, D), jnp.float32, minval=0.01, maxval=0.99)

    for cfg in (dict(scale_factor=1.0, ridge_lambda=0.0),
                dict(scale_factor=2.5, ridge_lambda=1e-3)):
        out = jax.block_until_ready(
            zinb_loss(x, mean, dispersion, pi, tile_rows=32, tile_cols=256, **cfg))
        ref = zinb_loss_ref(x, mean, dispersion, pi, **cfg)
        assert bool(jnp.isfinite(out)), cfg
        tol = 1e-2 * max(1.0, abs(float(ref)))
        assert abs(float(out) - float(ref)) <= tol, (cfg, float(out), float(ref))

    # Case B: D not a multiple of 128 (exercises lane padding + feature-axis split)
    # and B divisible by the row tile (exercises the unmasked fast path).
    B2, D2 = 64, 200
    k2 = jax.random.split(jax.random.PRNGKey(1), 4)
    x2 = jax.random.poisson(k2[0], 3.0, (B2, D2)).astype(jnp.float32)
    mean2 = jax.random.uniform(k2[1], (B2, D2), jnp.float32, minval=0.05, maxval=6.0)
    disp2 = jax.random.uniform(k2[2], (B2, D2), jnp.float32, minval=0.1, maxval=2.0)
    pi2 = jax.random.uniform(k2[3], (B2, D2), jnp.float32, minval=0.01, maxval=0.99)
    out2 = jax.block_until_ready(
        zinb_loss(x2, mean2, disp2, pi2, scale_factor=1.3, ridge_lambda=1e-2))
    ref2 = zinb_loss_ref(x2, mean2, disp2, pi2, scale_factor=1.3, ridge_lambda=1e-2)
    assert bool(jnp.isfinite(out2))
    assert abs(float(out2) - float(ref2)) <= 1e-2 * max(1.0, abs(float(ref2))), (
        float(out2), float(ref2))

    print("KERNEL_OK")
</pallas_src>

<mosaic_0001>
module attributes {stable_mosaic.version = 11 : i64} {
  func.func @_zinb_loss_kernel(%arg0: i32, %arg1: i32, %arg2: memref<32x256xf32, #tpu.memory_space<vmem>>, %arg3: memref<32x256xf32, #tpu.memory_space<vmem>>, %arg4: memref<32x256xf32, #tpu.memory_space<vmem>>, %arg5: memref<32x256xf32, #tpu.memory_space<vmem>>, %arg6: memref<8x256xf32, #tpu.memory_space<vmem>>, %arg7: memref<8x256xf32, #tpu.memory_space<vmem>>) attributes {dimension_semantics = [#tpu.dimension_semantics<parallel>, #tpu.dimension_semantics<arbitrary>], iteration_bounds = array<i64: 2, 4>, scalar_prefetch = 0 : i64, scratch_operands = 0 : i64, tpu.core_type = #tpu.core_type<tc>, window_params = [{transform_indices = @transform_0, window_bounds = array<i64: 32, 256>}, {transform_indices = @transform_1, window_bounds = array<i64: 32, 256>}, {transform_indices = @transform_2, window_bounds = array<i64: 32, 256>}, {transform_indices = @transform_3, window_bounds = array<i64: 32, 256>}, {transform_indices = @transform_4, window_bounds = array<i64: 8, 256>}, {transform_indices = @transform_5, window_bounds = array<i64: 8, 256>}]} {
    %c0_i32 = arith.constant 0 : i32
    %0 = arith.cmpi eq, %arg1, %c0_i32 : i32
    %1 = arith.extui %0 : i1 to i32
    %c0_i32_0 = arith.constant 0 : i32
    %2 = arith.cmpi ne, %1, %c0_i32_0 : i32
    scf.if %2 {
      %cst_73 = arith.constant 0.000000e+00 : f32
      %215 = vector.broadcast %cst_73 : f32 to vector<8x256xf32>
      %c0_74 = arith.constant 0 : index
      %c0_75 = arith.constant 0 : index
      %216 = vector.load %arg6[%c0_74, %c0_75] : memref<8x256xf32, #tpu.memory_space<vmem>>, vector<8x256xf32>
      tpu.vector_store %arg6[%c0_74, %c0_75], %215 {strides = array<i32>} : memref<8x256xf32, #tpu.memory_space<vmem>>, vector<8x256xf32>,
      %cst_76 = arith.constant 0.000000e+00 : f32
      %217 = vector.broadcast %cst_76 : f32 to vector<8x256xf32>
      %c0_77 = arith.constant 0 : index
      %c0_78 = arith.constant 0 : index
      %218 = vector.load %arg7[%c0_77, %c0_78] : memref<8x256xf32, #tpu.memory_space<vmem>>, vector<8x256xf32>
      tpu.vector_store %arg7[%c0_77, %c0_78], %217 {strides = array<i32>} : memref<8x256xf32, #tpu.memory_space<vmem>>, vector<8x256xf32>,
    } else {
    }
    %c0 = arith.constant 0 : index
    %c0_1 = arith.constant 0 : index
    %3 = vector.load %arg2[%c0, %c0_1] : memref<32x256xf32, #tpu.memory_space<vmem>>, vector<32x256xf32>
    %c0_2 = arith.constant 0 : index
    %c0_3 = arith.constant 0 : index
    %4 = vector.load %arg3[%c0_2, %c0_3] : memref<32x256xf32, #tpu.memory_space<vmem>>, vector<32x256xf32>
    %cst = arith.constant 1.000000e+00 : f32
    %5 = vector.broadcast %cst : f32 to vector<32x256xf32>
    %6 = arith.mulf %4, %5 : vector<32x256xf32>
    %c0_4 = arith.constant 0 : index
    %c0_5 = arith.constant 0 : index
    %7 = vector.load %arg4[%c0_4, %c0_5] : memref<32x256xf32, #tpu.memory_space<vmem>>, vector<32x256xf32>
    %c0_6 = arith.constant 0 : index
    %c0_7 = arith.constant 0 : index
    %8 = vector.load %arg5[%c0_6, %c0_7] : memref<32x256xf32, #tpu.memory_space<vmem>>, vector<32x256xf32>
    %cst_8 = arith.constant 1.000000e-10 : f32
    %9 = vector.broadcast %cst_8 : f32 to vector<32x256xf32>
    %10 = arith.addf %7, %9 : vector<32x256xf32>
    %cst_9 = arith.constant 8.000000e+00 : f32
    %11 = vector.broadcast %cst_9 : f32 to vector<32x256xf32>
    %12 = arith.cmpf olt, %10, %11 : vector<32x256xf32>
    %cst_10 = arith.constant 8.000000e+00 : f32
    %13 = vector.broadcast %cst_10 : f32 to vector<32x256xf32>
    %14 = arith.minimumf %10, %13 : vector<32x256xf32>
    %cst_11 = arith.constant 1.000000e+00 : f32
    %15 = vector.broadcast %cst_11 : f32 to vector<32x256xf32>
    %16 = arith.addf %14, %15 : vector<32x256xf32>
    %17 = arith.mulf %14, %16 : vector<32x256xf32>
    %cst_12 = arith.constant 2.000000e+00 : f32
    %18 = vector.broadcast %cst_12 : f32 to vector<32x256xf32>
    %19 = arith.addf %14, %18 : vector<32x256xf32>
    %20 = arith.mulf %17, %19 : vector<32x256xf32>
    %cst_13 = arith.constant 3.000000e+00 : f32
    %21 = vector.broadcast %cst_13 : f32 to vector<32x256xf32>
    %22 = arith.addf %14, %21 : vector<32x256xf32>
    %23 = arith.mulf %20, %22 : vector<32x256xf32>
    %cst_14 = arith.constant 4.000000e+00 : f32
    %24 = vector.broadcast %cst_14 : f32 to vector<32x256xf32>
    %25 = arith.addf %14, %24 : vector<32x256xf32>
    %26 = arith.mulf %23, %25 : vector<32x256xf32>
    %cst_15 = arith.constant 5.000000e+00 : f32
    %27 = vector.broadcast %cst_15 : f32 to vector<32x256xf32>
    %28 = arith.addf %14, %27 : vector<32x256xf32>
    %29 = arith.mulf %26, %28 : vector<32x256xf32>
    %cst_16 = arith.constant 6.000000e+00 : f32
    %30 = vector.broadcast %cst_16 : f32 to vector<32x256xf32>
    %31 = arith.addf %14, %30 : vector<32x256xf32>
    %32 = arith.mulf %29, %31 : vector<32x256xf32>
    %cst_17 = arith.constant 7.000000e+00 : f32
    %33 = vector.broadcast %cst_17 : f32 to vector<32x256xf32>
    %34 = arith.addf %14, %33 : vector<32x256xf32>
    %35 = arith.mulf %32, %34 : vector<32x256xf32>
    %36 = math.log %35 : vector<32x256xf32>
    %cst_18 = arith.constant 0.000000e+00 : f32
    %37 = vector.broadcast %cst_18 : f32 to vector<32x256xf32>
    %38 = arith.select %12, %36, %37 : vector<32x256xi1>, vector<32x256xf32>
    %cst_19 = arith.constant 8.000000e+00 : f32
    %39 = vector.broadcast %cst_19 : f32 to vector<32x256xf32>
    %40 = arith.addf %10, %39 : vector<32x256xf32>
    %41 = arith.select %12, %40, %10 : vector<32x256xi1>, vector<32x256xf32>
    %42 = tpu.reciprocal %41 {approx = true} : vector<32x256xf32> -> vector<32x256xf32>
    %43 = arith.mulf %42, %42 : vector<32x256xf32>
    %cst_20 = arith.constant 7.93650805E-4 : f32
    %44 = vector.broadcast %cst_20 : f32 to vector<32x256xf32>
    %45 = arith.mulf %43, %44 : vector<32x256xf32>
    %cst_21 = arith.constant -0.00277777785 : f32
    %46 = vector.broadcast %cst_21 : f32 to vector<32x256xf32>
    %47 = arith.addf %46, %45 : vector<32x256xf32>
    %48 = arith.mulf %43, %47 : vector<32x256xf32>
    %cst_22 = arith.constant 0.0833333358 : f32
    %49 = vector.broadcast %cst_22 : f32 to vector<32x256xf32>
    %50 = arith.addf %49, %48 : vector<32x256xf32>
    %51 = arith.mulf %42, %50 : vector<32x256xf32>
    %cst_23 = arith.constant 5.000000e-01 : f32
    %52 = vector.broadcast %cst_23 : f32 to vector<32x256xf32>
    %53 = arith.subf %41, %52 : vector<32x256xf32>
    %54 = math.log %41 : vector<32x256xf32>
    %55 = arith.mulf %53, %54 : vector<32x256xf32>
    %56 = arith.subf %55, %41 : vector<32x256xf32>
    %cst_24 = arith.constant 0.918938517 : f32
    %57 = vector.broadcast %cst_24 : f32 to vector<32x256xf32>
    %58 = arith.addf %56, %57 : vector<32x256xf32>
    %59 = arith.addf %58, %51 : vector<32x256xf32>
    %60 = arith.subf %59, %38 : vector<32x256xf32>
    %cst_25 = arith.constant 1.000000e+00 : f32
    %61 = vector.broadcast %cst_25 : f32 to vector<32x256xf32>
    %62 = arith.addf %3, %61 : vector<32x256xf32>
    %cst_26 = arith.constant 8.000000e+00 : f32
    %63 = vector.broadcast %cst_26 : f32 to vector<32x256xf32>
    %64 = arith.cmpf olt, %62, %63 : vector<32x256xf32>
    %cst_27 = arith.constant 8.000000e+00 : f32
    %65 = vector.broadcast %cst_27 : f32 to vector<32x256xf32>
    %66 = arith.minimumf %62, %65 : vector<32x256xf32>
    %cst_28 = arith.constant 1.000000e+00 : f32
    %67 = vector.broadcast %cst_28 : f32 to vector<32x256xf32>
    %68 = arith.addf %66, %67 : vector<32x256xf32>
    %69 = arith.mulf %66, %68 : vector<32x256xf32>
    %cst_29 = arith.constant 2.000000e+00 : f32
    %70 = vector.broadcast %cst_29 : f32 to vector<32x256xf32>
    %71 = arith.addf %66, %70 : vector<32x256xf32>
    %72 = arith.mulf %69, %71 : vector<32x256xf32>
    %cst_30 = arith.constant 3.000000e+00 : f32
    %73 = vector.broadcast %cst_30 : f32 to vector<32x256xf32>
    %74 = arith.addf %66, %73 : vector<32x256xf32>
    %75 = arith.mulf %72, %74 : vector<32x256xf32>
    %cst_31 = arith.constant 4.000000e+00 : f32
    %76 = vector.broadcast %cst_31 : f32 to vector<32x256xf32>
    %77 = arith.addf %66, %76 : vector<32x256xf32>
    %78 = arith.mulf %75, %77 : vector<32x256xf32>
    %cst_32 = arith.constant 5.000000e+00 : f32
    %79 = vector.broadcast %cst_32 : f32 to vector<32x256xf32>
    %80 = arith.addf %66, %79 : vector<32x256xf32>
    %81 = arith.mulf %78, %80 : vector<32x256xf32>
    %cst_33 = arith.constant 6.000000e+00 : f32
    %82 = vector.broadcast %cst_33 : f32 to vector<32x256xf32>
    %83 = arith.addf %66, %82 : vector<32x256xf32>
    %84 = arith.mulf %81, %83 : vector<32x256xf32>
    %cst_34 = arith.constant 7.000000e+00 : f32
    %85 = vector.broadcast %cst_34 : f32 to vector<32x256xf32>
    %86 = arith.addf %66, %85 : vector<32x256xf32>
    %87 = arith.mulf %84, %86 : vector<32x256xf32>
    %88 = math.log %87 : vector<32x256xf32>
    %cst_35 = arith.constant 0.000000e+00 : f32
    %89 = vector.broadcast %cst_35 : f32 to vector<32x256xf32>
    %90 = arith.select %64, %88, %89 : vector<32x256xi1>, vector<32x256xf32>
    %cst_36 = arith.constant 8.000000e+00 : f32
    %91 = vector.broadcast %cst_36 : f32 to vector<32x256xf32>
    %92 = arith.addf %62, %91 : vector<32x256xf32>
    %93 = arith.select %64, %92, %62 : vector<32x256xi1>, vector<32x256xf32>
    %94 = tpu.reciprocal %93 {approx = true} : vector<32x256xf32> -> vector<32x256xf32>
    %95 = arith.mulf %94, %94 : vector<32x256xf32>
    %cst_37 = arith.constant 7.93650805E-4 : f32
    %96 = vector.broadcast %cst_37 : f32 to vector<32x256xf32>
    %97 = arith.mulf %95, %96 : vector<32x256xf32>
    %cst_38 = arith.constant -0.00277777785 : f32
    %98 = vector.broadcast %cst_38 : f32 to vector<32x256xf32>
    %99 = arith.addf %98, %97 : vector<32x256xf32>
    %100 = arith.mulf %95, %99 : vector<32x256xf32>
    %cst_39 = arith.constant 0.0833333358 : f32
    %101 = vector.broadcast %cst_39 : f32 to vector<32x256xf32>
    %102 = arith.addf %101, %100 : vector<32x256xf32>
    %103 = arith.mulf %94, %102 : vector<32x256xf32>
    %cst_40 = arith.constant 5.000000e-01 : f32
    %104 = vector.broadcast %cst_40 : f32 to vector<32x256xf32>
    %105 = arith.subf %93, %104 : vector<32x256xf32>
    %106 = math.log %93 : vector<32x256xf32>
    %107 = arith.mulf %105, %106 : vector<32x256xf32>
    %108 = arith.subf %107, %93 : vector<32x256xf32>
    %cst_41 = arith.constant 0.918938517 : f32
    %109 = vector.broadcast %cst_41 : f32 to vector<32x256xf32>
    %110 = arith.addf %108, %109 : vector<32x256xf32>
    %111 = arith.addf %110, %103 : vector<32x256xf32>
    %112 = arith.subf %111, %90 : vector<32x256xf32>
    %113 = arith.addf %60, %112 : vector<32x256xf32>
    %114 = arith.addf %3, %7 : vector<32x256xf32>
    %cst_42 = arith.constant 1.000000e-10 : f32
    %115 = vector.broadcast %cst_42 : f32 to vector<32x256xf32>
    %116 = arith.addf %114, %115 : vector<32x256xf32>
    %cst_43 = arith.constant 8.000000e+00 : f32
    %117 = vector.broadcast %cst_43 : f32 to vector<32x256xf32>
    %118 = arith.cmpf olt, %116, %117 : vector<32x256xf32>
    %cst_44 = arith.constant 8.000000e+00 : f32
    %119 = vector.broadcast %cst_44 : f32 to vector<32x256xf32>
    %120 = arith.minimumf %116, %119 : vector<32x256xf32>
    %cst_45 = arith.constant 1.000000e+00 : f32
    %121 = vector.broadcast %cst_45 : f32 to vector<32x256xf32>
    %122 = arith.addf %120, %121 : vector<32x256xf32>
    %123 = arith.mulf %120, %122 : vector<32x256xf32>
    %cst_46 = arith.constant 2.000000e+00 : f32
    %124 = vector.broadcast %cst_46 : f32 to vector<32x256xf32>
    %125 = arith.addf %120, %124 : vector<32x256xf32>
    %126 = arith.mulf %123, %125 : vector<32x256xf32>
    %cst_47 = arith.constant 3.000000e+00 : f32
    %127 = vector.broadcast %cst_47 : f32 to vector<32x256xf32>
    %128 = arith.addf %120, %127 : vector<32x256xf32>
    %129 = arith.mulf %126, %128 : vector<32x256xf32>
    %cst_48 = arith.constant 4.000000e+00 : f32
    %130 = vector.broadcast %cst_48 : f32 to vector<32x256xf32>
    %131 = arith.addf %120, %130 : vector<32x256xf32>
    %132 = arith.mulf %129, %131 : vector<32x256xf32>
    %cst_49 = arith.constant 5.000000e+00 : f32
    %133 = vector.broadcast %cst_49 : f32 to vector<32x256xf32>
    %134 = arith.addf %120, %133 : vector<32x256xf32>
    %135 = arith.mulf %132, %134 : vector<32x256xf32>
    %cst_50 = arith.constant 6.000000e+00 : f32
    %136 = vector.broadcast %cst_50 : f32 to vector<32x256xf32>
    %137 = arith.addf %120, %136 : vector<32x256xf32>
    %138 = arith.mulf %135, %137 : vector<32x256xf32>
    %cst_51 = arith.constant 7.000000e+00 : f32
    %139 = vector.broadcast %cst_51 : f32 to vector<32x256xf32>
    %140 = arith.addf %120, %139 : vector<32x256xf32>
    %141 = arith.mulf %138, %140 : vector<32x256xf32>
    %142 = math.log %141 : vector<32x256xf32>
    %cst_52 = arith.constant 0.000000e+00 : f32
    %143 = vector.broadcast %cst_52 : f32 to vector<32x256xf32>
    %144 = arith.select %118, %142, %143 : vector<32x256xi1>, vector<32x256xf32>
    %cst_53 = arith.constant 8.000000e+00 : f32
    %145 = vector.broadcast %cst_53 : f32 to vector<32x256xf32>
    %146 = arith.addf %116, %145 : vector<32x256xf32>
    %147 = arith.select %118, %146, %116 : vector<32x256xi1>, vector<32x256xf32>
    %148 = tpu.reciprocal %147 {approx = true} : vector<32x256xf32> -> vector<32x256xf32>
    %149 = arith.mulf %148, %148 : vector<32x256xf32>
    %cst_54 = arith.constant 7.93650805E-4 : f32
    %150 = vector.broadcast %cst_54 : f32 to vector<32x256xf32>
    %151 = arith.mulf %149, %150 : vector<32x256xf32>
    %cst_55 = arith.constant -0.00277777785 : f32
    %152 = vector.broadcast %cst_55 : f32 to vector<32x256xf32>
    %153 = arith.addf %152, %151 : vector<32x256xf32>
    %154 = arith.mulf %149, %153 : vector<32x256xf32>
    %cst_56 = arith.constant 0.0833333358 : f32
    %155 = vector.broadcast %cst_56 : f32 to vector<32x256xf32>
    %156 = arith.addf %155, %154 : vector<32x256xf32>
    %157 = arith.mulf %148, %156 : vector<32x256xf32>
    %cst_57 = arith.constant 5.000000e-01 : f32
    %158 = vector.broadcast %cst_57 : f32 to vector<32x256xf32>
    %159 = arith.subf %147, %158 : vector<32x256xf32>
    %160 = math.log %147 : vector<32x256xf32>
    %161 = arith.mulf %159, %160 : vector<32x256xf32>
    %162 = arith.subf %161, %147 : vector<32x256xf32>
    %cst_58 = arith.constant 0.918938517 : f32
    %163 = vector.broadcast %cst_58 : f32 to vector<32x256xf32>
    %164 = arith.addf %162, %163 : vector<32x256xf32>
    %165 = arith.addf %164, %157 : vector<32x256xf32>
    %166 = arith.subf %165, %144 : vector<32x256xf32>
    %167 = arith.subf %113, %166 : vector<32x256xf32>
    %cst_59 = arith.constant 1.000000e-10 : f32
    %168 = vector.broadcast %cst_59 : f32 to vector<32x256xf32>
    %169 = arith.addf %7, %168 : vector<32x256xf32>
    %170 = math.log %169 : vector<32x256xf32>
    %171 = arith.mulf %7, %170 : vector<32x256xf32>
    %172 = arith.subf %167, %171 : vector<32x256xf32>
    %cst_60 = arith.constant 1.000000e-10 : f32
    %173 = vector.broadcast %cst_60 : f32 to vector<32x256xf32>
    %174 = arith.addf %6, %173 : vector<32x256xf32>
    %175 = math.log %174 : vector<32x256xf32>
    %176 = arith.mulf %3, %175 : vector<32x256xf32>
    %177 = arith.subf %172, %176 : vector<32x256xf32>
    %178 = arith.addf %7, %3 : vector<32x256xf32>
    %179 = arith.addf %7, %6 : vector<32x256xf32>
    %cst_61 = arith.constant 1.000000e-10 : f32
    %180 = vector.broadcast %cst_61 : f32 to vector<32x256xf32>
    %181 = arith.addf %179, %180 : vector<32x256xf32>
    %182 = math.log %181 : vector<32x256xf32>
    %183 = arith.mulf %178, %182 : vector<32x256xf32>
    %184 = arith.addf %177, %183 : vector<32x256xf32>
    %cst_62 = arith.constant 1.000000e+00 : f32
    %185 = vector.broadcast %cst_62 : f32 to vector<32x256xf32>
    %186 = arith.subf %185, %8 : vector<32x256xf32>
    %cst_63 = arith.constant 0.000000e+00 : f32
    %187 = vector.broadcast %cst_63 : f32 to vector<32x256xf32>
    %188 = arith.subf %187, %184 : vector<32x256xf32>
    %189 = math.exp %188 : vector<32x256xf32>
    %190 = arith.mulf %186, %189 : vector<32x256xf32>
    %191 = arith.addf %8, %190 : vector<32x256xf32>
    %cst_64 = arith.constant 1.000000e-10 : f32
    %192 = vector.broadcast %cst_64 : f32 to vector<32x256xf32>
    %193 = arith.addf %191, %192 : vector<32x256xf32>
    %194 = math.log %193 : vector<32x256xf32>
    %cst_65 = arith.constant 0.000000e+00 : f32
    %195 = vector.broadcast %cst_65 : f32 to vector<32x256xf32>
    %196 = arith.subf %195, %194 : vector<32x256xf32>
    %cst_66 = arith.constant 9.99999993E-9 : f32
    %197 = vector.broadcast %cst_66 : f32 to vector<32x256xf32>
    %198 = arith.cmpf olt, %3, %197 : vector<32x256xf32>
    %cst_67 = arith.constant 1.000000e+00 : f32
    %199 = vector.broadcast %cst_67 : f32 to vector<32x256xf32>
    %200 = arith.subf %199, %8 : vector<32x256xf32>
    %cst_68 = arith.constant 1.000000e-10 : f32
    %201 = vector.broadcast %cst_68 : f32 to vector<32x256xf32>
    %202 = arith.addf %200, %201 : vector<32x256xf32>
    %203 = math.log %202 : vector<32x256xf32>
    %cst_69 = arith.constant 0.000000e+00 : f32
    %204 = vector.broadcast %cst_69 : f32 to vector<32x256xf32>
    %205 = arith.subf %204, %203 : vector<32x256xf32>
    %206 = arith.addf %205, %184 : vector<32x256xf32>
    %207 = arith.select %198, %196, %206 : vector<32x256xi1>, vector<32x256xf32>
    %208 = arith.mulf %8, %8 : vector<32x256xf32>
    %c3_i32 = arith.constant 3 : i32
    %209 = arith.cmpi slt, %arg1, %c3_i32 : i32
    %210 = arith.extui %209 : i1 to i32
    %c0_i32_70 = arith.constant 0 : i32
    %211 = arith.cmpi ne, %210, %c0_i32_70 : i32
    scf.if %211 {
      %c0_73 = arith.constant 0 : index
      %c0_74 = arith.constant 0 : index
      %215 = vector.load %arg6[%c0_73, %c0_74] : memref<8x256xf32, #tpu.memory_space<vmem>>, vector<8x256xf32>
      %216 = vector.extract_strided_slice %207 {offsets = [0, 0], sizes = [8, 256], strides = [1, 1]} : vector<32x256xf32> to vector<8x256xf32>
      %217 = vector.extract_strided_slice %207 {offsets = [8, 0], sizes = [8, 256], strides = [1, 1]} : vector<32x256xf32> to vector<8x256xf32>
      %218 = arith.addf %216, %217 : vector<8x256xf32>
      %219 = vector.extract_strided_slice %207 {offsets = [16, 0], sizes = [8, 256], strides = [1, 1]} : vector<32x256xf32> to vector<8x256xf32>
      %220 = arith.addf %218, %219 : vector<8x256xf32>
      %221 = vector.extract_strided_slice %207 {offsets = [24, 0], sizes = [8, 256], strides = [1, 1]} : vector<32x256xf32> to vector<8x256xf32>
      %222 = arith.addf %220, %221 : vector<8x256xf32>
      %223 = arith.addf %215, %222 : vector<8x256xf32>
      %c0_75 = arith.constant 0 : index
      %c0_76 = arith.constant 0 : index
      %224 = vector.load %arg6[%c0_75, %c0_76] : memref<8x256xf32, #tpu.memory_space<vmem>>, vector<8x256xf32>
      tpu.vector_store %arg6[%c0_75, %c0_76], %223 {strides = array<i32>} : memref<8x256xf32, #tpu.memory_space<vmem>>, vector<8x256xf32>,
      %c0_77 = arith.constant 0 : index
      %c0_78 = arith.constant 0 : index
      %225 = vector.load %arg7[%c0_77, %c0_78] : memref<8x256xf32, #tpu.memory_space<vmem>>, vector<8x256xf32>
      %226 = vector.extract_strided_slice %208 {offsets = [0, 0], sizes = [8, 256], strides = [1, 1]} : vector<32x256xf32> to vector<8x256xf32>
      %227 = vector.extract_strided_slice %208 {offsets = [8, 0], sizes = [8, 256], strides = [1, 1]} : vector<32x256xf32> to vector<8x256xf32>
      %228 = arith.addf %226, %227 : vector<8x256xf32>
      %229 = vector.extract_strided_slice %208 {offsets = [16, 0], sizes = [8, 256], strides = [1, 1]} : vector<32x256xf32> to vector<8x256xf32>
      %230 = arith.addf %228, %229 : vector<8x256xf32>
      %231 = vector.extract_strided_slice %208 {offsets = [24, 0], sizes = [8, 256], strides = [1, 1]} : vector<32x256xf32> to vector<8x256xf32>
      %232 = arith.addf %230, %231 : vector<8x256xf32>
      %233 = arith.addf %225, %232 : vector<8x256xf32>
      %c0_79 = arith.constant 0 : index
      %c0_80 = arith.constant 0 : index
      %234 = vector.load %arg7[%c0_79, %c0_80] : memref<8x256xf32, #tpu.memory_space<vmem>>, vector<8x256xf32>
      tpu.vector_store %arg7[%c0_79, %c0_80], %233 {strides = array<i32>} : memref<8x256xf32, #tpu.memory_space<vmem>>, vector<8x256xf32>,
    } else {
    }
    %c3_i32_71 = arith.constant 3 : i32
    %212 = arith.cmpi eq, %arg1, %c3_i32_71 : i32
    %213 = arith.extui %212 : i1 to i32
    %c0_i32_72 = arith.constant 0 : i32
    %214 = arith.cmpi ne, %213, %c0_i32_72 : i32
    scf.if %214 {
      %c32_i32 = arith.constant 32 : i32
      %215 = arith.muli %arg1, %c32_i32 : i32
      %216 = tpu.iota {dimensions = array<i32: 0>} : vector<32x1xi32>
      %217 = vector.broadcast %215 : i32 to vector<32x1xi32>
      %218 = arith.addi %217, %216 : vector<32x1xi32>
      %c100_i32 = arith.constant 100 : i32
      %219 = vector.broadcast %c100_i32 : i32 to vector<32x1xi32>
      %220 = arith.cmpi slt, %218, %219 : vector<32x1xi32>
      %cst_73 = arith.constant 0.000000e+00 : f32
      %221 = vector.shape_cast %220 : vector<32x1xi1> to vector<32x1xi1>
      %222 = vector.broadcast %221 : vector<32x1xi1> to vector<32x256xi1>
      %223 = vector.broadcast %cst_73 : f32 to vector<32x256xf32>
      %224 = arith.select %222, %207, %223 : vector<32x256xi1>, vector<32x256xf32>
      %cst_74 = arith.constant 0.000000e+00 : f32
      %225 = vector.shape_cast %220 : vector<32x1xi1> to vector<32x1xi1>
      %226 = vector.broadcast %225 : vector<32x1xi1> to vector<32x256xi1>
      %227 = vector.broadcast %cst_74 : f32 to vector<32x256xf32>
      %228 = arith.select %226, %208, %227 : vector<32x256xi1>, vector<32x256xf32>
      %c0_75 = arith.constant 0 : index
      %c0_76 = arith.constant 0 : index
      %229 = vector.load %arg6[%c0_75, %c0_76] : memref<8x256xf32, #tpu.memory_space<vmem>>, vector<8x256xf32>
      %230 = vector.extract_strided_slice %224 {offsets = [0, 0], sizes = [8, 256], strides = [1, 1]} : vector<32x256xf32> to vector<8x256xf32>
      %231 = vector.extract_strided_slice %224 {offsets = [8, 0], sizes = [8, 256], strides = [1, 1]} : vector<32x256xf32> to vector<8x256xf32>
      %232 = arith.addf %230, %231 : vector<8x256xf32>
      %233 = vector.extract_strided_slice %224 {offsets = [16, 0], sizes = [8, 256], strides = [1, 1]} : vector<32x256xf32> to vector<8x256xf32>
      %234 = arith.addf %232, %233 : vector<8x256xf32>
      %235 = vector.extract_strided_slice %224 {offsets = [24, 0], sizes = [8, 256], strides = [1, 1]} : vector<32x256xf32> to vector<8x256xf32>
      %236 = arith.addf %234, %235 : vector<8x256xf32>
      %237 = arith.addf %229, %236 : vector<8x256xf32>
      %c0_77 = arith.constant 0 : index
      %c0_78 = arith.constant 0 : index
      %238 = vector.load %arg6[%c0_77, %c0_78] : memref<8x256xf32, #tpu.memory_space<vmem>>, vector<8x256xf32>
      tpu.vector_store %arg6[%c0_77, %c0_78], %237 {strides = array<i32>} : memref<8x256xf32, #tpu.memory_space<vmem>>, vector<8x256xf32>,
      %c0_79 = arith.constant 0 : index
      %c0_80 = arith.constant 0 : index
      %239 = vector.load %arg7[%c0_79, %c0_80] : memref<8x256xf32, #tpu.memory_space<vmem>>, vector<8x256xf32>
      %240 = vector.extract_strided_slice %228 {offsets = [0, 0], sizes = [8, 256], strides = [1, 1]} : vector<32x256xf32> to vector<8x256xf32>
      %241 = vector.extract_strided_slice %228 {offsets = [8, 0], sizes = [8, 256], strides = [1, 1]} : vector<32x256xf32> to vector<8x256xf32>
      %242 = arith.addf %240, %241 : vector<8x256xf32>
      %243 = vector.extract_strided_slice %228 {offsets = [16, 0], sizes = [8, 256], strides = [1, 1]} : vector<32x256xf32> to vector<8x256xf32>
      %244 = arith.addf %242, %243 : vector<8x256xf32>
      %245 = vector.extract_strided_slice %228 {offsets = [24, 0], sizes = [8, 256], strides = [1, 1]} : vector<32x256xf32> to vector<8x256xf32>
      %246 = arith.addf %244, %245 : vector<8x256xf32>
      %247 = arith.addf %239, %246 : vector<8x256xf32>
      %c0_81 = arith.constant 0 : index
      %c0_82 = arith.constant 0 : index
      %248 = vector.load %arg7[%c0_81, %c0_82] : memref<8x256xf32, #tpu.memory_space<vmem>>, vector<8x256xf32>
      tpu.vector_store %arg7[%c0_81, %c0_82], %247 {strides = array<i32>} : memref<8x256xf32, #tpu.memory_space<vmem>>, vector<8x256xf32>,
    } else {
    }
    return
  }
  func.func @transform_0(%arg0: i32, %arg1: i32) -> (i32, i32) {
    %c0_i32 = arith.constant 0 : i32
    return %arg1, %arg0 : i32, i32
  }
  func.func @transform_1(%arg0: i32, %arg1: i32) -> (i32, i32) {
    %c0_i32 = arith.constant 0 : i32
    return %arg1, %arg0 : i32, i32
  }
  func.func @transform_2(%arg0: i32, %arg1: i32) -> (i32, i32) {
    %c0_i32 = arith.constant 0 : i32
    return %arg1, %arg0 : i32, i32
  }
  func.func @transform_3(%arg0: i32, %arg1: i32) -> (i32, i32) {
    %c0_i32 = arith.constant 0 : i32
    return %arg1, %arg0 : i32, i32
  }
  func.func @transform_4(%arg0: i32, %arg1: i32) -> (i32, i32) {
    %c0_i32 = arith.constant 0 : i32
    %c0_i32_0 = arith.constant 0 : i32
    return %c0_i32, %arg0 : i32, i32
  }
  func.func @transform_5(%arg0: i32, %arg1: i32) -> (i32, i32) {
    %c0_i32 = arith.constant 0 : i32
    %c0_i32_0 = arith.constant 0 : i32
    return %c0_i32, %arg0 : i32, i32
  }
}

</mosaic_0001>

<llo_original>
// kernel: zinb_loss.1
$region0: #{zinb_loss.1}
  #allocation0 [shape = 'u32[]', space=smem, size = 0x4, offset = 0x4, fixed_abs, tag = 'smem constant byte address 0x4 - core index']
  #allocation1 [shape = 'u32[144,128]{1,0:T(1,128)}', space=vmem, size = 0x12000, scoped, tag = 'internal scratch']
  %s0 = inlined_call_operand.hbm [shape: f32[100,512], index: 0, kind: input, shape index: {}]
  %s1 = inlined_call_operand.hbm [shape: f32[100,512], index: 1, kind: input, shape index: {}]
  %s2 = inlined_call_operand.hbm [shape: f32[100,512], index: 2, kind: input, shape index: {}]
  %s3 = inlined_call_operand.hbm [shape: f32[100,512], index: 3, kind: input, shape index: {}]
  %s4 = inlined_call_operand.vmem [shape: f32[8,512], index: 4, kind: output, shape index: {0}]
  %s5 = inlined_call_operand.vmem [shape: f32[8,512], index: 5, kind: output, shape index: {1}]
  %6 = xla_tuple %s4, %s5
  %s7 = sld [smem:[#allocation0]]
  $region85: #{zinb_loss.1} parent=0
    _
  %s9 = ssub.s32 1, %s7
  %s10 = scalar_select 0, %s9, %s7
  $region1: #{zinb_loss.1} parent=0
    #allocation2 [shape = 'u8[65536]{0}', space=vmem, size = 0x10000, scoped, tag = 'input window, operand 0']
    #allocation3 [shape = 's32[2]{0}', space=sflag, size = 0x8, scoped, tag = 'scoped memory for zinb_loss.1']
    #allocation4 [shape = 'u8[65536]{0}', space=vmem, size = 0x10000, scoped, tag = 'input window, operand 1']
    #allocation5 [shape = 's32[2]{0}', space=sflag, size = 0x8, scoped, tag = 'scoped memory for zinb_loss.1']
    #allocation6 [shape = 'u8[65536]{0}', space=vmem, size = 0x10000, scoped, tag = 'input window, operand 2']
    #allocation7 [shape = 'u8[65536]{0}', space=vmem, size = 0x10000, scoped, tag = 'input window, operand 3']
    #allocation8 [shape = 's32[2]{0}', space=sflag, size = 0x8, scoped, tag = 'scoped memory for zinb_loss.1']
    %11 = vsyncpa [#allocation3], 0
    %s12 = scalar_lea.sflag [#allocation3], 1
    %13 = vsyncpa %s12, 0
    %14 = vsyncpa [#allocation5], 0
    %s15 = scalar_lea.sflag [#allocation5], 1
    %16 = vsyncpa %s15, 0
    %17 = vsyncpa [#allocation8], 0
    %s18 = scalar_lea.sflag [#allocation8], 1
    %19 = vsyncpa %s18, 0
    loop: start=0, step=1, limit=10
    $region2: #{zinb_loss.1} parent=1 // loop_pre_header
      _
    $region3: #{zinb_loss.1} parent=1 // loop_header
      %s21 = sphi 0, %s25
      %p22 = scmp.ge.s32.totalorder %s21, 10
      %s28 = sphi 0, %s40
      %s29 = sphi 0, %s36
      %s30 = sphi 0, %s28
      %s31 = sphi 0, %s29
      %s32 = sphi 0, %s30
      %s33 = sphi 0, %s31
      %s45 = sphi 0, %s47
      %s48 = sphi 0, %s45
      %s49 = sphi 0, %s48
      %s65 = sphi 0, %s49
      %s73 = sphi 0, %s75
      %s76 = sphi 0, %s73
      %s77 = sphi 0, %s76
      %s93 = sphi 0, %s77
      %s101 = sphi 0, %s103
      %s104 = sphi 0, %s101
      %s105 = sphi 0, %s104
      %s121 = sphi 0, %s105
      %s129 = sphi 0, %s131
      %s132 = sphi 0, %s129
      %s133 = sphi 0, %s132
      %s149 = sphi 0, %s133
      %s155 = sphi 0, %s157
      %s158 = sphi 0, %s155
      %s159 = sphi 0, %s158
      %s175 = sphi 0, %s159
      %s181 = sphi 0, %s183
      %s184 = sphi 0, %s181
      %s185 = sphi 0, %s184
      %s201 = sphi 0, %s185
    $region4: #{zinb_loss.1} parent=1 // loop_header_branch
      %24 = sbr.rel (%p22) target = $region8
    $region5: #{zinb_loss.1} parent=1 // loop_body
      %s26 = ssub.s32 %s21, 1
      %s27 = ssub.s32 %s21, 2
      %s34 = sadd.s32 1, %s29
      %p35 = scmp.ge.s32.totalorder %s34, 4
      %s36 = scalar_select %p35, 0, %s34
      %s37 = sadd.s32 1, %s28
      %s38 = scalar_select %p35, %s37, %s28
      %p39 = scmp.ge.s32.totalorder %s38, 2
      %s40 = scalar_select %p39, 0, %s38
      %s41 = ssub.s32 %s29, %s36
      %s42 = ssub.s32 %s28, %s40
      %s43 = sor.u32 %s41, %s42
      %p44 = scmp.eq.s32.totalorder %s43, 0
      %s46 = sadd.s32 %s45, 1
      %s47 = scalar_select %p44, %s45, %s46
      %p50 = pneg %p44
      %p51 = scmp.eq.s32.totalorder %s21, 7
      %p52 = por %p50, %p51
      %p53 = scmp.ne.s32.totalorder %s45, %s48
      %p54 = scmp.eq.s32.totalorder %s21, 0
      %p55 = por %p53, %p54
      %p56 = scmp.ne.s32.totalorder %s45, %s48
      %p57 = scmp.eq.s32.totalorder %s26, 7
      %p58 = por %p56, %p57
      %p59 = scmp.ne.s32.totalorder %s48, %s49
      %p60 = scmp.eq.s32.totalorder %s26, 0
      %p61 = por %p59, %p60
      %p62 = scmp.ne.s32.totalorder %s48, %s49
      %p63 = scmp.eq.s32.totalorder %s27, 7
      %p64 = por %p62, %p63
      %p66 = scmp.ne.s32.totalorder %s49, %s65
      %p67 = scmp.eq.s32.totalorder %s27, 0
      %p68 = por %p66, %p67
      %s69 = ssub.s32 %s29, %s36
      %s70 = ssub.s32 %s28, %s40
      %s71 = sor.u32 %s69, %s70
      %p72 = scmp.eq.s32.totalorder %s71, 0
      %s74 = sadd.s32 %s73, 1
      %s75 = scalar_select %p72, %s73, %s74
      %p78 = pneg %p72
      %p79 = scmp.eq.s32.totalorder %s21, 7
      %p80 = por %p78, %p79
      %p81 = scmp.ne.s32.totalorder %s73, %s76
      %p82 = scmp.eq.s32.totalorder %s21, 0
      %p83 = por %p81, %p82
      %p84 = scmp.ne.s32.totalorder %s73, %s76
      %p85 = scmp.eq.s32.totalorder %s26, 7
      %p86 = por %p84, %p85
      %p87 = scmp.ne.s32.totalorder %s76, %s77
      %p88 = scmp.eq.s32.totalorder %s26, 0
      %p89 = por %p87, %p88
      %p90 = scmp.ne.s32.totalorder %s76, %s77
      %p91 = scmp.eq.s32.totalorder %s27, 7
      %p92 = por %p90, %p91
      %p94 = scmp.ne.s32.totalorder %s77, %s93
      %p95 = scmp.eq.s32.totalorder %s27, 0
      %p96 = por %p94, %p95
      %s97 = ssub.s32 %s29, %s36
      %s98 = ssub.s32 %s28, %s40
      %s99 = sor.u32 %s97, %s98
      %p100 = scmp.eq.s32.totalorder %s99, 0
      %s102 = sadd.s32 %s101, 1
      %s103 = scalar_select %p100, %s101, %s102
      %p106 = pneg %p100
      %p107 = scmp.eq.s32.totalorder %s21, 7
      %p108 = por %p106, %p107
      %p109 = scmp.ne.s32.totalorder %s101, %s104
      %p110 = scmp.eq.s32.totalorder %s21, 0
      %p111 = por %p109, %p110
      %p112 = scmp.ne.s32.totalorder %s101, %s104
      %p113 = scmp.eq.s32.totalorder %s26, 7
      %p114 = por %p112, %p113
      %p115 = scmp.ne.s32.totalorder %s104, %s105
      %p116 = scmp.eq.s32.totalorder %s26, 0
      %p117 = por %p115, %p116
      %p118 = scmp.ne.s32.totalorder %s104, %s105
      %p119 = scmp.eq.s32.totalorder %s27, 7
      %p120 = por %p118, %p119
      %p122 = scmp.ne.s32.totalorder %s105, %s121
      %p123 = scmp.eq.s32.totalorder %s27, 0
      %p124 = por %p122, %p123
      %s125 = ssub.s32 %s29, %s36
      %s126 = ssub.s32 %s28, %s40
      %s127 = sor.u32 %s125, %s126
      %p128 = scmp.eq.s32.totalorder %s127, 0
      %s130 = sadd.s32 %s129, 1
      %s131 = scalar_select %p128, %s129, %s130
      %p134 = pneg %p128
      %p135 = scmp.eq.s32.totalorder %s21, 7
      %p136 = por %p134, %p135
      %p137 = scmp.ne.s32.totalorder %s129, %s132
      %p138 = scmp.eq.s32.totalorder %s21, 0
      %p139 = por %p137, %p138
      %p140 = scmp.ne.s32.totalorder %s129, %s132
      %p141 = scmp.eq.s32.totalorder %s26, 7
      %p142 = por %p140, %p141
      %p143 = scmp.ne.s32.totalorder %s132, %s133
      %p144 = scmp.eq.s32.totalorder %s26, 0
      %p145 = por %p143, %p144
      %p146 = scmp.ne.s32.totalorder %s132, %s133
      %p147 = scmp.eq.s32.totalorder %s27, 7
      %p148 = por %p146, %p147
      %p150 = scmp.ne.s32.totalorder %s133, %s149
      %p151 = scmp.eq.s32.totalorder %s27, 0
      %p152 = por %p150, %p151
      %s153 = ssub.s32 %s28, %s40
      %p154 = scmp.eq.s32.totalorder %s153, 0
      %s156 = sadd.s32 %s155, 1
      %s157 = scalar_select %p154, %s155, %s156
      %p160 = pneg %p154
      %p161 = scmp.eq.s32.totalorder %s21, 7
      %p162 = por %p160, %p161
      %p163 = scmp.ne.s32.totalorder %s155, %s158
      %p164 = scmp.eq.s32.totalorder %s21, 0
      %p165 = por %p163, %p164
      %p166 = scmp.ne.s32.totalorder %s155, %s158
      %p167 = scmp.eq.s32.totalorder %s26, 7
      %p168 = por %p166, %p167
      %p169 = scmp.ne.s32.totalorder %s158, %s159
      %p170 = scmp.eq.s32.totalorder %s26, 0
      %p171 = por %p169, %p170
      %p172 = scmp.ne.s32.totalorder %s158, %s159
      %p173 = scmp.eq.s32.totalorder %s27, 7
      %p174 = por %p172, %p173
      %p176 = scmp.ne.s32.totalorder %s159, %s175
      %p177 = scmp.eq.s32.totalorder %s27, 0
      %p178 = por %p176, %p177
      %s179 = ssub.s32 %s28, %s40
      %p180 = scmp.eq.s32.totalorder %s179, 0
      %s182 = sadd.s32 %s181, 1
      %s183 = scalar_select %p180, %s181, %s182
      %p186 = pneg %p180
      %p187 = scmp.eq.s32.totalorder %s21, 7
      %p188 = por %p186, %p187
      %p189 = scmp.ne.s32.totalorder %s181, %s184
      %p190 = scmp.eq.s32.totalorder %s21, 0
      %p191 = por %p189, %p190
      %p192 = scmp.ne.s32.totalorder %s181, %s184
      %p193 = scmp.eq.s32.totalorder %s26, 7
      %p194 = por %p192, %p193
      %p195 = scmp.ne.s32.totalorder %s184, %s185
      %p196 = scmp.eq.s32.totalorder %s26, 0
      %p197 = por %p195, %p196
      %p198 = scmp.ne.s32.totalorder %s184, %s185
      %p199 = scmp.eq.s32.totalorder %s27, 7
      %p200 = por %p198, %p199
      %p202 = scmp.ne.s32.totalorder %s185, %s201
      %p203 = scmp.eq.s32.totalorder %s27, 0
      %p204 = por %p202, %p203
      %p205 = scmp.le.s32.totalorder 1, %s21
      %p206 = scmp.lt.s32.totalorder %s21, 9
      %p207 = pnand %p205, %p206
      %p208 = pneg %p207
      // Predicated region
      $region9: #{zinb_loss.1} parent=5 // pred_check
        _
      $region10: #{zinb_loss.1} parent=5 // pred_check_branch
        %210 = sbr.rel (%p207) target = $region12
      $region11: #{zinb_loss.1} parent=5 // pred_region
        %s211 = ssub.s32 %s21, 1
      $region12: #{zinb_loss.1} parent=5 // pred_fallthru
        _
      %p212 = scmp.lt.s32.totalorder %s21, 8
      // Predicated region
      $region13: #{zinb_loss.1} parent=5 // pred_check
        %p213 = pneg %p212
      $region14: #{zinb_loss.1} parent=5 // pred_check_branch
        %215 = sbr.rel (%p213) target = $region16
      $region15: #{zinb_loss.1} parent=5 // pred_region
        // Predicated region
        $region17: #{zinb_loss.1} parent=15 // pred_check
          %p216 = pneg %p55
        $region18: #{zinb_loss.1} parent=15 // pred_check_branch
          %218 = sbr.rel (%p216) target = $region20
        $region19: #{zinb_loss.1} parent=15 // pred_region
          %s219 = sand.u32 %s45, 1
          %s220 = scalar_lea.sflag [#allocation3], %s219
          %s221 = sand.u32 %s45, 1
          %s222 = smul.addr %s221, 64
          %s223 = scalar_lea.vmem [#allocation2], %s222
          %s224 = smul.u32 4, %s29
          %s225 = smul.u32 2, %s28
          %s226 = ssub.s32 13, %s224
          %p227 = scmp.lt.s32.totalorder %s226, 4
          %s228 = scalar_select %p227, %s226, 4
          %s229 = smul.u32 128, %s228
          %s230 = smul.u32 %s229, 2
          %s232 = ssub.s32 1024, %s230
          %233 = vsyncadd %s220, %s232
          %p234 = scmp.ne.s32.totalorder 0, %s230
          %s235 = smul.addr %s224, 4
          %s236 = sadd.s32 %s225, %s235
          %s237 = smul.addr %s236, 128
          %s238 = scalar_lea.hbm %s0, %s237
          %s239 = smul.u32 16, %s228
          %s240 = sshll.u32 %s223, 4
          %s241 = int_to_ptr.vmem [resolvable:$true] %s240
          %s242 = sshll.u32 %s239, 4
          %246 = dma.hbm_to_vmem [thread:$0]  (%p234), %s238, %s242, %s241, %s220, 512, 256, 16
        $region20: #{zinb_loss.1} parent=15 // pred_fallthru
          _
        // Predicated region
        $region21: #{zinb_loss.1} parent=15 // pred_check
          %p247 = pneg %p83
        $region22: #{zinb_loss.1} parent=15 // pred_check_branch
          %249 = sbr.rel (%p247) target = $region24
        $region23: #{zinb_loss.1} parent=15 // pred_region
          %s250 = sand.u32 %s21, 1
          %s251 = scalar_lea.sflag [#allocation5], %s250
          %s252 = sand.u32 %s73, 1
          %s253 = smul.addr %s252, 64
          %s254 = scalar_lea.vmem [#allocation4], %s253
          %s255 = smul.u32 4, %s29
          %s256 = smul.u32 2, %s28
          %s257 = ssub.s32 13, %s255
          %p258 = scmp.lt.s32.totalorder %s257, 4
          %s259 = scalar_select %p258, %s257, 4
          %s260 = smul.u32 128, %s259
          %s261 = smul.u32 %s260, 2
          %s263 = ssub.s32 1024, %s261
          %264 = vsyncadd %s251, %s263
          %p265 = scmp.ne.s32.totalorder 0, %s261
          %s266 = smul.addr %s255, 4
          %s267 = sadd.s32 %s256, %s266
          %s268 = smul.addr %s267, 128
          %s269 = scalar_lea.hbm %s1, %s268
          %s270 = smul.u32 16, %s259
          %s271 = sshll.u32 %s254, 4
          %s272 = int_to_ptr.vmem [resolvable:$true] %s271
          %s273 = sshll.u32 %s270, 4
          %277 = dma.hbm_to_vmem [thread:$0]  (%p265), %s269, %s273, %s272, %s251, 512, 256, 16
        $region24: #{zinb_loss.1} parent=15 // pred_fallthru
          _
        // Predicated region
        $region25: #{zinb_loss.1} parent=15 // pred_check
          %p278 = pneg %p111
        $region26: #{zinb_loss.1} parent=15 // pred_check_branch
          %280 = sbr.rel (%p278) target = $region28
        $region27: #{zinb_loss.1} parent=15 // pred_region
          %s281 = sand.u32 %s21, 1
          %s282 = scalar_lea.sflag [#allocation5], %s281
          %s283 = sand.u32 %s101, 1
          %s284 = smul.addr %s283, 64
          %s285 = scalar_lea.vmem [#allocation6], %s284
          %s286 = smul.u32 4, %s29
          %s287 = smul.u32 2, %s28
          %s288 = ssub.s32 13, %s286
          %p289 = scmp.lt.s32.totalorder %s288, 4
          %s290 = scalar_select %p289, %s288, 4
          %s291 = smul.u32 128, %s290
          %s292 = smul.u32 %s291, 2
          %s294 = ssub.s32 1024, %s292
          %295 = vsyncadd %s282, %s294
          %p296 = scmp.ne.s32.totalorder 0, %s292
          %s297 = smul.addr %s286, 4
          %s298 = sadd.s32 %s287, %s297
          %s299 = smul.addr %s298, 128
          %s300 = scalar_lea.hbm %s2, %s299
          %s301 = smul.u32 16, %s290
          %s302 = sshll.u32 %s285, 4
          %s303 = int_to_ptr.vmem [resolvable:$true] %s302
          %s304 = sshll.u32 %s301, 4
          %308 = dma.hbm_to_vmem [thread:$0]  (%p296), %s300, %s304, %s303, %s282, 512, 256, 16
        $region28: #{zinb_loss.1} parent=15 // pred_fallthru
          _
        // Predicated region
        $region29: #{zinb_loss.1} parent=15 // pred_check
          %p309 = pneg %p139
        $region30: #{zinb_loss.1} parent=15 // pred_check_branch
          %311 = sbr.rel (%p309) target = $region32
        $region31: #{zinb_loss.1} parent=15 // pred_region
          %s312 = sand.u32 %s129, 1
          %s313 = scalar_lea.sflag [#allocation8], %s312
          %s314 = sand.u32 %s129, 1
          %s315 = smul.addr %s314, 64
          %s316 = scalar_lea.vmem [#allocation7], %s315
          %s317 = smul.u32 4, %s29
          %s318 = smul.u32 2, %s28
          %s319 = ssub.s32 13, %s317
          %p320 = scmp.lt.s32.totalorder %s319, 4
          %s321 = scalar_select %p320, %s319, 4
          %s322 = smul.u32 128, %s321
          %s323 = smul.u32 %s322, 2
          %s325 = ssub.s32 1024, %s323
          %326 = vsyncadd %s313, %s325
          %p327 = scmp.ne.s32.totalorder 0, %s323
          %s328 = smul.addr %s317, 4
          %s329 = sadd.s32 %s318, %s328
          %s330 = smul.addr %s329, 128
          %s331 = scalar_lea.hbm %s3, %s330
          %s332 = smul.u32 16, %s321
          %s333 = sshll.u32 %s316, 4
          %s334 = int_to_ptr.vmem [resolvable:$true] %s333
          %s335 = sshll.u32 %s332, 4
          %339 = dma.hbm_to_vmem [thread:$0]  (%p327), %s331, %s335, %s334, %s313, 512, 256, 16
        $region32: #{zinb_loss.1} parent=15 // pred_fallthru
          _
      $region16: #{zinb_loss.1} parent=5 // pred_fallthru
        _
      %p340 = scmp.le.s32.totalorder 1, %s21
      %p341 = scmp.lt.s32.totalorder %s21, 9
      %p342 = pnand %p340, %p341
      %p343 = pneg %p342
      // Predicated region
      $region33: #{zinb_loss.1} parent=5 // pred_check
        _
      $region34: #{zinb_loss.1} parent=5 // pred_check_branch
        %345 = sbr.rel (%p342) target = $region36
      $region35: #{zinb_loss.1} parent=5 // pred_region
        %s346 = ssub.s32 %s21, 1
        %s347 = sand.u32 %s48, 1
        %s348 = scalar_lea.sflag [#allocation3], %s347
        %s349 = sand.u32 %s48, 1
        %s350 = smul.addr %s349, 64
        %s351 = scalar_lea.vmem [#allocation2], %s350
        // Predicated region
        $region37: #{zinb_loss.1} parent=35 // pred_check
          %p352 = pneg %p61
        $region38: #{zinb_loss.1} parent=35 // pred_check_branch
          %354 = sbr.rel (%p352) target = $region40
        $region39: #{zinb_loss.1} parent=35 // pred_region
          %355 = dma.done %s348, 1024
        $region40: #{zinb_loss.1} parent=35 // pred_fallthru
          _
        %s356 = sand.u32 %s26, 1
        %s357 = scalar_lea.sflag [#allocation5], %s356
        %s358 = sand.u32 %s76, 1
        %s359 = smul.addr %s358, 64
        %s360 = scalar_lea.vmem [#allocation4], %s359
        // Predicated region
        $region41: #{zinb_loss.1} parent=35 // pred_check
          %p361 = pneg %p89
        $region42: #{zinb_loss.1} parent=35 // pred_check_branch
          %363 = sbr.rel (%p361) target = $region44
        $region43: #{zinb_loss.1} parent=35 // pred_region
          %364 = dma.done %s357, 1024
        $region44: #{zinb_loss.1} parent=35 // pred_fallthru
          _
        %s365 = sand.u32 %s26, 1
        %s366 = scalar_lea.sflag [#allocation5], %s365
        %s367 = sand.u32 %s104, 1
        %s368 = smul.addr %s367, 64
        %s369 = scalar_lea.vmem [#allocation6], %s368
        // Predicated region
        $region45: #{zinb_loss.1} parent=35 // pred_check
          %p370 = pneg %p117
        $region46: #{zinb_loss.1} parent=35 // pred_check_branch
          %372 = sbr.rel (%p370) target = $region48
        $region47: #{zinb_loss.1} parent=35 // pred_region
          %373 = dma.done %s366, 1024
        $region48: #{zinb_loss.1} parent=35 // pred_fallthru
          _
        %s374 = sand.u32 %s132, 1
        %s375 = scalar_lea.sflag [#allocation8], %s374
        %s376 = sand.u32 %s132, 1
        %s377 = smul.addr %s376, 64
        %s378 = scalar_lea.vmem [#allocation7], %s377
        // Predicated region
        $region49: #{zinb_loss.1} parent=35 // pred_check
          %p379 = pneg %p145
        $region50: #{zinb_loss.1} parent=35 // pred_check_branch
          %381 = sbr.rel (%p379) target = $region52
        $region51: #{zinb_loss.1} parent=35 // pred_region
          %382 = dma.done %s375, 1024
        $region52: #{zinb_loss.1} parent=35 // pred_fallthru
          _
        %s383 = sand.u32 %s48, 1
        %s384 = scalar_lea.sflag [#allocation3], %s383
        %s385 = sand.u32 %s48, 1
        %s386 = smul.addr %s385, 64
        %s387 = scalar_lea.vmem [#allocation2], %s386
        %p388 = pneg %p61
        %p389 = pneg %p58
        %s390 = sand.u32 %s26, 1
        %s391 = scalar_lea.sflag [#allocation5], %s390
        %s392 = sand.u32 %s76, 1
        %s393 = smul.addr %s392, 64
        %s394 = scalar_lea.vmem [#allocation4], %s393
        %p395 = pneg %p89
        %p396 = pneg %p86
        %s397 = sand.u32 %s26, 1
        %s398 = scalar_lea.sflag [#allocation5], %s397
        %s399 = sand.u32 %s104, 1
        %s400 = smul.addr %s399, 64
        %s401 = scalar_lea.vmem [#allocation6], %s400
        %p402 = pneg %p117
        %p403 = pneg %p114
        %s404 = sand.u32 %s132, 1
        %s405 = scalar_lea.sflag [#allocation8], %s404
        %s406 = sand.u32 %s132, 1
        %s407 = smul.addr %s406, 64
        %s408 = scalar_lea.vmem [#allocation7], %s407
        %p409 = pneg %p145
        %p410 = pneg %p142
        %p411 = pneg %p171
        %p412 = pneg %p168
        %s413 = smul.u32 2, %s30
        %p414 = scmp.lt.s32.totalorder %s413, 3
        %s415 = scalar_select %p414, %s413, 3
        %s416 = smul.addr %s415, 8
        %s417 = scalar_lea.vmem %s4, %s416
        %p418 = pneg %p197
        %p419 = pneg %p194
        %s420 = smul.u32 2, %s30
        %p421 = scmp.lt.s32.totalorder %s420, 3
        %s422 = scalar_select %p421, %s420, 3
        %s423 = smul.addr %s422, 8
        %s424 = scalar_lea.vmem %s5, %s423
        %s425 = smul.u32 4, %s31
        %s426 = smul.u32 2, %s30
        %s427 = ssub.s32 13, %s425
        %p428 = scmp.lt.s32.totalorder %s427, 4
        %s429 = scalar_select %p428, %s427, 4
        %s430 = smul.u32 128, %s429
        %s431 = smul.u32 %s430, 2
        %s432 = smul.u32 4, %s31
        %s433 = smul.u32 2, %s30
        %s434 = ssub.s32 13, %s432
        %p435 = scmp.lt.s32.totalorder %s434, 4
        %s436 = scalar_select %p435, %s434, 4
        %s437 = smul.u32 128, %s436
        %s438 = smul.u32 %s437, 2
        %s439 = smul.u32 4, %s31
        %s440 = smul.u32 2, %s30
        %s441 = ssub.s32 13, %s439
        %p442 = scmp.lt.s32.totalorder %s441, 4
        %s443 = scalar_select %p442, %s441, 4
        %s444 = smul.u32 128, %s443
        %s445 = smul.u32 %s444, 2
        %s446 = smul.u32 4, %s31
        %s447 = smul.u32 2, %s30
        %s448 = ssub.s32 13, %s446
        %p449 = scmp.lt.s32.totalorder %s448, 4
        %s450 = scalar_select %p449, %s448, 4
        %s451 = smul.u32 128, %s450
        %s452 = smul.u32 %s451, 2
        %s453 = smul.u32 2, %s30
        %p454 = scmp.lt.s32.totalorder %s453, 3
        %s455 = scalar_select %p454, %s453, 3
        %s456 = smul.addr %s455, 8
        %s457 = scalar_lea.vmem %s4, %s456
        %s458 = smul.u32 2, %s30
        %s459 = smul.u32 2, %s30
        %p460 = scmp.lt.s32.totalorder %s459, 3
        %s461 = scalar_select %p460, %s459, 3
        %s462 = smul.addr %s461, 8
        %s463 = scalar_lea.vmem %s5, %s462
        %s464 = smul.u32 2, %s30
        %p465 = scmp.eq.s32.totalorder %s31, 0
        // Predicated region
        $region53: #{zinb_loss.1} parent=35 // pred_check
          %p466 = pneg %p465
        $region54: #{zinb_loss.1} parent=35 // pred_check_branch
          %468 = sbr.rel (%p466) target = $region56
        $region55: #{zinb_loss.1} parent=35 // pred_region
          %469 = vst [vmem:[%s457] sm:$0xff] 0.0
          %470 = vst [vmem:[%s457 + $0x8] sm:$0xff] 0.0
          %471 = vst [vmem:[%s463] sm:$0xff] 0.0
          %472 = vst [vmem:[%s463 + $0x8] sm:$0xff] 0.0
        $region56: #{zinb_loss.1} parent=35 // pred_fallthru
          _
        %v473 = vld [vmem:[%s351] sm:$0xff]
        %v474 = vld [vmem:[%s351 + $0x8] sm:$0xff]
        %v475 = vld [vmem:[%s351 + $0x10] sm:$0xff]
        %v476 = vld [vmem:[%s351 + $0x18] sm:$0xff]
        %v477 = vld [vmem:[%s351 + $0x20] sm:$0xff]
        %v478 = vld [vmem:[%s351 + $0x28] sm:$0xff]
        %v479 = vld [vmem:[%s351 + $0x30] sm:$0xff]
        %v480 = vld [vmem:[%s351 + $0x38] sm:$0xff]
        %v481 = vld [vmem:[%s360] sm:$0xff]
        %v482 = vld [vmem:[%s360 + $0x8] sm:$0xff]
        %v483 = vld [vmem:[%s360 + $0x10] sm:$0xff]
        %v484 = vld [vmem:[%s360 + $0x18] sm:$0xff]
        %v485 = vld [vmem:[%s360 + $0x20] sm:$0xff]
        %v486 = vld [vmem:[%s360 + $0x28] sm:$0xff]
        %v487 = vld [vmem:[%s360 + $0x30] sm:$0xff]
        %v488 = vld [vmem:[%s360 + $0x38] sm:$0xff]
        %v489 = vld [vmem:[%s369] sm:$0xff]
        %v490 = vld [vmem:[%s369 + $0x8] sm:$0xff]
        %v491 = vld [vmem:[%s369 + $0x10] sm:$0xff]
        %v492 = vld [vmem:[%s369 + $0x18] sm:$0xff]
        %v493 = vld [vmem:[%s369 + $0x20] sm:$0xff]
        %v494 = vld [vmem:[%s369 + $0x28] sm:$0xff]
        %v495 = vld [vmem:[%s369 + $0x30] sm:$0xff]
        %v496 = vld [vmem:[%s369 + $0x38] sm:$0xff]
        %v497 = vld [vmem:[%s378] sm:$0xff]
        %v498 = vld [vmem:[%s378 + $0x8] sm:$0xff]
        %v499 = vld [vmem:[%s378 + $0x10] sm:$0xff]
        %v500 = vld [vmem:[%s378 + $0x18] sm:$0xff]
        %v501 = vld [vmem:[%s378 + $0x20] sm:$0xff]
        %v502 = vld [vmem:[%s378 + $0x28] sm:$0xff]
        %v503 = vld [vmem:[%s378 + $0x30] sm:$0xff]
        %v504 = vld [vmem:[%s378 + $0x38] sm:$0xff]
        %v505 = vadd.f32 %v489, 1e-10
        %v506 = vadd.f32 %v490, 1e-10
        %v507 = vadd.f32 %v491, 1e-10
        %v508 = vadd.f32 %v492, 1e-10
        %v509 = vadd.f32 %v493, 1e-10
        %v510 = vadd.f32 %v494, 1e-10
        %v511 = vadd.f32 %v495, 1e-10
        %v512 = vadd.f32 %v496, 1e-10
        %vm513 = vcmp.lt.f32.partialorder %v505, 8.0
        %vm514 = vcmp.lt.f32.partialorder %v506, 8.0
        %vm515 = vcmp.lt.f32.partialorder %v507, 8.0
        %vm516 = vcmp.lt.f32.partialorder %v508, 8.0
        %vm517 = vcmp.lt.f32.partialorder %v509, 8.0
        %vm518 = vcmp.lt.f32.partialorder %v510, 8.0
        %vm519 = vcmp.lt.f32.partialorder %v511, 8.0
        %vm520 = vcmp.lt.f32.partialorder %v512, 8.0
        %v521 = vmin.f32 %v505, 8.0
        %v522 = vmin.f32 %v506, 8.0
        %v523 = vmin.f32 %v507, 8.0
        %v524 = vmin.f32 %v508, 8.0
        %v525 = vmin.f32 %v509, 8.0
        %v526 = vmin.f32 %v510, 8.0
        %v527 = vmin.f32 %v511, 8.0
        %v528 = vmin.f32 %v512, 8.0
        %v529 = vadd.f32 %v521, 1.0
        %v530 = vadd.f32 %v522, 1.0
        %v531 = vadd.f32 %v523, 1.0
        %v532 = vadd.f32 %v524, 1.0
        %v533 = vadd.f32 %v525, 1.0
        %v534 = vadd.f32 %v526, 1.0
        %v535 = vadd.f32 %v527, 1.0
        %v536 = vadd.f32 %v528, 1.0
        %v537 = vmul.f32 %v521, %v529
        %v538 = vmul.f32 %v522, %v530
        %v539 = vmul.f32 %v523, %v531
        %v540 = vmul.f32 %v524, %v532
        %v541 = vmul.f32 %v525, %v533
        %v542 = vmul.f32 %v526, %v534
        %v543 = vmul.f32 %v527, %v535
        %v544 = vmul.f32 %v528, %v536
        %v545 = vadd.f32 %v521, 2.0
        %v546 = vadd.f32 %v522, 2.0
        %v547 = vadd.f32 %v523, 2.0
        %v548 = vadd.f32 %v524, 2.0
        %v549 = vadd.f32 %v525, 2.0
        %v550 = vadd.f32 %v526, 2.0
        %v551 = vadd.f32 %v527, 2.0
        %v552 = vadd.f32 %v528, 2.0
        %v553 = vmul.f32 %v537, %v545
        %v554 = vmul.f32 %v538, %v546
        %v555 = vmul.f32 %v539, %v547
        %v556 = vmul.f32 %v540, %v548
        %v557 = vmul.f32 %v541, %v549
        %v558 = vmul.f32 %v542, %v550
        %v559 = vmul.f32 %v543, %v551
        %v560 = vmul.f32 %v544, %v552
        %v561 = vadd.f32 %v521, 3.0
        %v562 = vadd.f32 %v522, 3.0
        %v563 = vadd.f32 %v523, 3.0
        %v564 = vadd.f32 %v524, 3.0
        %v565 = vadd.f32 %v525, 3.0
        %v566 = vadd.f32 %v526, 3.0
        %v567 = vadd.f32 %v527, 3.0
        %v568 = vadd.f32 %v528, 3.0
        %v569 = vmul.f32 %v553, %v561
        %v570 = vmul.f32 %v554, %v562
        %v571 = vmul.f32 %v555, %v563
        %v572 = vmul.f32 %v556, %v564
        %v573 = vmul.f32 %v557, %v565
        %v574 = vmul.f32 %v558, %v566
        %v575 = vmul.f32 %v559, %v567
        %v576 = vmul.f32 %v560, %v568
        %v577 = vadd.f32 %v521, 4.0
        %v578 = vadd.f32 %v522, 4.0
        %v579 = vadd.f32 %v523, 4.0
        %v580 = vadd.f32 %v524, 4.0
        %v581 = vadd.f32 %v525, 4.0
        %v582 = vadd.f32 %v526, 4.0
        %v583 = vadd.f32 %v527, 4.0
        %v584 = vadd.f32 %v528, 4.0
        %v585 = vmul.f32 %v569, %v577
        %v586 = vmul.f32 %v570, %v578
        %v587 = vmul.f32 %v571, %v579
        %v588 = vmul.f32 %v572, %v580
        %v589 = vmul.f32 %v573, %v581
        %v590 = vmul.f32 %v574, %v582
        %v591 = vmul.f32 %v575, %v583
        %v592 = vmul.f32 %v576, %v584
        %v593 = vadd.f32 %v521, 5.0
        %v594 = vadd.f32 %v522, 5.0
        %v595 = vadd.f32 %v523, 5.0
        %v596 = vadd.f32 %v524, 5.0
        %v597 = vadd.f32 %v525, 5.0
        %v598 = vadd.f32 %v526, 5.0
        %v599 = vadd.f32 %v527, 5.0
        %v600 = vadd.f32 %v528, 5.0
        %v601 = vmul.f32 %v585, %v593
        %v602 = vmul.f32 %v586, %v594
        %v603 = vmul.f32 %v587, %v595
        %v604 = vmul.f32 %v588, %v596
        %v605 = vmul.f32 %v589, %v597
        %v606 = vmul.f32 %v590, %v598
        %v607 = vmul.f32 %v591, %v599
        %v608 = vmul.f32 %v592, %v600
        %v609 = vadd.f32 %v521, 6.0
        %v610 = vadd.f32 %v522, 6.0
        %v611 = vadd.f32 %v523, 6.0
        %v612 = vadd.f32 %v524, 6.0
        %v613 = vadd.f32 %v525, 6.0
        %v614 = vadd.f32 %v526, 6.0
        %v615 = vadd.f32 %v527, 6.0
        %v616 = vadd.f32 %v528, 6.0
        %v617 = vmul.f32 %v601, %v609
        %v618 = vmul.f32 %v602, %v610
        %v619 = vmul.f32 %v603, %v611
        %v620 = vmul.f32 %v604, %v612
        %v621 = vmul.f32 %v605, %v613
        %v622 = vmul.f32 %v606, %v614
        %v623 = vmul.f32 %v607, %v615
        %v624 = vmul.f32 %v608, %v616
        %v625 = vadd.f32 %v521, 7.0
        %v626 = vadd.f32 %v522, 7.0
        %v627 = vadd.f32 %v523, 7.0
        %v628 = vadd.f32 %v524, 7.0
        %v629 = vadd.f32 %v525, 7.0
        %v630 = vadd.f32 %v526, 7.0
        %v631 = vadd.f32 %v527, 7.0
        %v632 = vadd.f32 %v528, 7.0
        %v633 = vmul.f32 %v617, %v625
        %v634 = vmul.f32 %v618, %v626
        %v635 = vmul.f32 %v619, %v627
        %v636 = vmul.f32 %v620, %v628
        %v637 = vmul.f32 %v621, %v629
        %v638 = vmul.f32 %v622, %v630
        %v639 = vmul.f32 %v623, %v631
        %v640 = vmul.f32 %v624, %v632
        %v641 = vlog2.pop %v633
        %v642 = vmul.f32 %v641, 0.6931472
        %v643 = vlog2.pop %v634
        %v644 = vmul.f32 %v643, 0.6931472
        %v645 = vlog2.pop %v635
        %v646 = vmul.f32 %v645, 0.6931472
        %v647 = vlog2.pop %v636
        %v648 = vmul.f32 %v647, 0.6931472
        %v649 = vlog2.pop %v637
        %v650 = vmul.f32 %v649, 0.6931472
        %v651 = vlog2.pop %v638
        %v652 = vmul.f32 %v651, 0.6931472
        %v653 = vlog2.pop %v639
        %v654 = vmul.f32 %v653, 0.6931472
        %v655 = vlog2.pop %v640
        %v656 = vmul.f32 %v655, 0.6931472
        %v657 = vsel %vm513, %v642, 0.0
        %v658 = vsel %vm514, %v644, 0.0
        %v659 = vsel %vm515, %v646, 0.0
        %v660 = vsel %vm516, %v648, 0.0
        %v661 = vsel %vm517, %v650, 0.0
        %v662 = vsel %vm518, %v652, 0.0
        %v663 = vsel %vm519, %v654, 0.0
        %v664 = vsel %vm520, %v656, 0.0
        %v665 = vadd.f32 %v505, 8.0
        %v666 = vadd.f32 %v506, 8.0
        %v667 = vadd.f32 %v507, 8.0
        %v668 = vadd.f32 %v508, 8.0
        %v669 = vadd.f32 %v509, 8.0
        %v670 = vadd.f32 %v510, 8.0
        %v671 = vadd.f32 %v511, 8.0
        %v672 = vadd.f32 %v512, 8.0
        %v673 = vsel %vm513, %v665, %v505
        %v674 = vsel %vm514, %v666, %v506
        %v675 = vsel %vm515, %v667, %v507
        %v676 = vsel %vm516, %v668, %v508
        %v677 = vsel %vm517, %v669, %v509
        %v678 = vsel %vm518, %v670, %v510
        %v679 = vsel %vm519, %v671, %v511
        %v680 = vsel %vm520, %v672, %v512
        %v681 = vrcp.pop %v673
        %v682 = vrcp.pop %v674
        %v683 = vrcp.pop %v675
        %v684 = vrcp.pop %v676
        %v685 = vrcp.pop %v677
        %v686 = vrcp.pop %v678
        %v687 = vrcp.pop %v679
        %v688 = vrcp.pop %v680
        %v689 = vmul.f32 %v681, %v681
        %v690 = vmul.f32 %v682, %v682
        %v691 = vmul.f32 %v683, %v683
        %v692 = vmul.f32 %v684, %v684
        %v693 = vmul.f32 %v685, %v685
        %v694 = vmul.f32 %v686, %v686
        %v695 = vmul.f32 %v687, %v687
        %v696 = vmul.f32 %v688, %v688
        %v697 = vmul.f32 %v689, 0.0007936508
        %v698 = vmul.f32 %v690, 0.0007936508
        %v699 = vmul.f32 %v691, 0.0007936508
        %v700 = vmul.f32 %v692, 0.0007936508
        %v701 = vmul.f32 %v693, 0.0007936508
        %v702 = vmul.f32 %v694, 0.0007936508
        %v703 = vmul.f32 %v695, 0.0007936508
        %v704 = vmul.f32 %v696, 0.0007936508
        %v705 = vadd.f32 %v697, -0.0027777778
        %v706 = vadd.f32 %v698, -0.0027777778
        %v707 = vadd.f32 %v699, -0.0027777778
        %v708 = vadd.f32 %v700, -0.0027777778
        %v709 = vadd.f32 %v701, -0.0027777778
        %v710 = vadd.f32 %v702, -0.0027777778
        %v711 = vadd.f32 %v703, -0.0027777778
        %v712 = vadd.f32 %v704, -0.0027777778
        %v713 = vmul.f32 %v689, %v705
        %v714 = vmul.f32 %v690, %v706
        %v715 = vmul.f32 %v691, %v707
        %v716 = vmul.f32 %v692, %v708
        %v717 = vmul.f32 %v693, %v709
        %v718 = vmul.f32 %v694, %v710
        %v719 = vmul.f32 %v695, %v711
        %v720 = vmul.f32 %v696, %v712
        %v721 = vadd.f32 %v713, 0.083333336
        %v722 = vadd.f32 %v714, 0.083333336
        %v723 = vadd.f32 %v715, 0.083333336
        %v724 = vadd.f32 %v716, 0.083333336
        %v725 = vadd.f32 %v717, 0.083333336
        %v726 = vadd.f32 %v718, 0.083333336
        %v727 = vadd.f32 %v719, 0.083333336
        %v728 = vadd.f32 %v720, 0.083333336
        %v729 = vmul.f32 %v681, %v721
        %v730 = vmul.f32 %v682, %v722
        %v731 = vmul.f32 %v683, %v723
        %v732 = vmul.f32 %v684, %v724
        %v733 = vmul.f32 %v685, %v725
        %v734 = vmul.f32 %v686, %v726
        %v735 = vmul.f32 %v687, %v727
        %v736 = vmul.f32 %v688, %v728
        %v737 = vsub.f32 %v673, 0.5
        %v738 = vsub.f32 %v674, 0.5
        %v739 = vsub.f32 %v675, 0.5
        %v740 = vsub.f32 %v676, 0.5
        %v741 = vsub.f32 %v677, 0.5
        %v742 = vsub.f32 %v678, 0.5
        %v743 = vsub.f32 %v679, 0.5
        %v744 = vsub.f32 %v680, 0.5
        %v745 = vlog2.pop %v673
        %v746 = vmul.f32 %v745, 0.6931472
        %v747 = vlog2.pop %v674
        %v748 = vmul.f32 %v747, 0.6931472
        %v749 = vlog2.pop %v675
        %v750 = vmul.f32 %v749, 0.6931472
        %v751 = vlog2.pop %v676
        %v752 = vmul.f32 %v751, 0.6931472
        %v753 = vlog2.pop %v677
        %v754 = vmul.f32 %v753, 0.6931472
        %v755 = vlog2.pop %v678
        %v756 = vmul.f32 %v755, 0.6931472
        %v757 = vlog2.pop %v679
        %v758 = vmul.f32 %v757, 0.6931472
        %v759 = vlog2.pop %v680
        %v760 = vmul.f32 %v759, 0.6931472
        %v761 = vmul.f32 %v737, %v746
        %v762 = vmul.f32 %v738, %v748
        %v763 = vmul.f32 %v739, %v750
        %v764 = vmul.f32 %v740, %v752
        %v765 = vmul.f32 %v741, %v754
        %v766 = vmul.f32 %v742, %v756
        %v767 = vmul.f32 %v743, %v758
        %v768 = vmul.f32 %v744, %v760
        %v769 = vsub.f32 %v761, %v673
        %v770 = vsub.f32 %v762, %v674
        %v771 = vsub.f32 %v763, %v675
        %v772 = vsub.f32 %v764, %v676
        %v773 = vsub.f32 %v765, %v677
        %v774 = vsub.f32 %v766, %v678
        %v775 = vsub.f32 %v767, %v679
        %v776 = vsub.f32 %v768, %v680
        %v777 = vadd.f32 %v769, 0.9189385
        %v778 = vadd.f32 %v770, 0.9189385
        %v779 = vadd.f32 %v771, 0.9189385
        %v780 = vadd.f32 %v772, 0.9189385
        %v781 = vadd.f32 %v773, 0.9189385
        %v782 = vadd.f32 %v774, 0.9189385
        %v783 = vadd.f32 %v775, 0.9189385
        %v784 = vadd.f32 %v776, 0.9189385
        %v785 = vadd.f32 %v777, %v729
        %v786 = vadd.f32 %v778, %v730
        %v787 = vadd.f32 %v779, %v731
        %v788 = vadd.f32 %v780, %v732
        %v789 = vadd.f32 %v781, %v733
        %v790 = vadd.f32 %v782, %v734
        %v791 = vadd.f32 %v783, %v735
        %v792 = vadd.f32 %v784, %v736
        %v793 = vsub.f32 %v785, %v657
        %v794 = vsub.f32 %v786, %v658
        %v795 = vsub.f32 %v787, %v659
        %v796 = vsub.f32 %v788, %v660
        %v797 = vsub.f32 %v789, %v661
        %v798 = vsub.f32 %v790, %v662
        %v799 = vsub.f32 %v791, %v663
        %v800 = vsub.f32 %v792, %v664
        %v801 = vadd.f32 %v473, 1.0
        %v802 = vadd.f32 %v474, 1.0
        %v803 = vadd.f32 %v475, 1.0
        %v804 = vadd.f32 %v476, 1.0
        %v805 = vadd.f32 %v477, 1.0
        %v806 = vadd.f32 %v478, 1.0
        %v807 = vadd.f32 %v479, 1.0
        %v808 = vadd.f32 %v480, 1.0
        %vm809 = vcmp.lt.f32.partialorder %v801, 8.0
        %vm810 = vcmp.lt.f32.partialorder %v802, 8.0
        %vm811 = vcmp.lt.f32.partialorder %v803, 8.0
        %vm812 = vcmp.lt.f32.partialorder %v804, 8.0
        %vm813 = vcmp.lt.f32.partialorder %v805, 8.0
        %vm814 = vcmp.lt.f32.partialorder %v806, 8.0
        %vm815 = vcmp.lt.f32.partialorder %v807, 8.0
        %vm816 = vcmp.lt.f32.partialorder %v808, 8.0
        %v817 = vmin.f32 %v801, 8.0
        %v818 = vmin.f32 %v802, 8.0
        %v819 = vmin.f32 %v803, 8.0
        %v820 = vmin.f32 %v804, 8.0
        %v821 = vmin.f32 %v805, 8.0
        %v822 = vmin.f32 %v806, 8.0
        %v823 = vmin.f32 %v807, 8.0
        %v824 = vmin.f32 %v808, 8.0
        %v825 = vadd.f32 %v817, 1.0
        %v826 = vadd.f32 %v818, 1.0
        %v827 = vadd.f32 %v819, 1.0
        %v828 = vadd.f32 %v820, 1.0
        %v829 = vadd.f32 %v821, 1.0
        %v830 = vadd.f32 %v822, 1.0
        %v831 = vadd.f32 %v823, 1.0
        %v832 = vadd.f32 %v824, 1.0
        %v833 = vmul.f32 %v817, %v825
        %v834 = vmul.f32 %v818, %v826
        %v835 = vmul.f32 %v819, %v827
        %v836 = vmul.f32 %v820, %v828
        %v837 = vmul.f32 %v821, %v829
        %v838 = vmul.f32 %v822, %v830
        %v839 = vmul.f32 %v823, %v831
        %v840 = vmul.f32 %v824, %v832
        %v841 = vadd.f32 %v817, 2.0
        %v842 = vadd.f32 %v818, 2.0
        %v843 = vadd.f32 %v819, 2.0
        %v844 = vadd.f32 %v820, 2.0
        %v845 = vadd.f32 %v821, 2.0
        %v846 = vadd.f32 %v822, 2.0
        %v847 = vadd.f32 %v823, 2.0
        %v848 = vadd.f32 %v824, 2.0
        %v849 = vmul.f32 %v833, %v841
        %v850 = vmul.f32 %v834, %v842
        %v851 = vmul.f32 %v835, %v843
        %v852 = vmul.f32 %v836, %v844
        %v853 = vmul.f32 %v837, %v845
        %v854 = vmul.f32 %v838, %v846
        %v855 = vmul.f32 %v839, %v847
        %v856 = vmul.f32 %v840, %v848
        %v857 = vadd.f32 %v817, 3.0
        %v858 = vadd.f32 %v818, 3.0
        %v859 = vadd.f32 %v819, 3.0
        %v860 = vadd.f32 %v820, 3.0
        %v861 = vadd.f32 %v821, 3.0
        %v862 = vadd.f32 %v822, 3.0
        %v863 = vadd.f32 %v823, 3.0
        %v864 = vadd.f32 %v824, 3.0
        %v865 = vmul.f32 %v849, %v857
        %v866 = vmul.f32 %v850, %v858
        %v867 = vmul.f32 %v851, %v859
        %v868 = vmul.f32 %v852, %v860
        %v869 = vmul.f32 %v853, %v861
        %v870 = vmul.f32 %v854, %v862
        %v871 = vmul.f32 %v855, %v863
        %v872 = vmul.f32 %v856, %v864
        %v873 = vadd.f32 %v817, 4.0
        %v874 = vadd.f32 %v818, 4.0
        %v875 = vadd.f32 %v819, 4.0
        %v876 = vadd.f32 %v820, 4.0
        %v877 = vadd.f32 %v821, 4.0
        %v878 = vadd.f32 %v822, 4.0
        %v879 = vadd.f32 %v823, 4.0
        %v880 = vadd.f32 %v824, 4.0
        %v881 = vmul.f32 %v865, %v873
        %v882 = vmul.f32 %v866, %v874
        %v883 = vmul.f32 %v867, %v875
        %v884 = vmul.f32 %v868, %v876
        %v885 = vmul.f32 %v869, %v877
        %v886 = vmul.f32 %v870, %v878
        %v887 = vmul.f32 %v871, %v879
        %v888 = vmul.f32 %v872, %v880
        %v889 = vadd.f32 %v817, 5.0
        %v890 = vadd.f32 %v818, 5.0
        %v891 = vadd.f32 %v819, 5.0
        %v892 = vadd.f32 %v820, 5.0
        %v893 = vadd.f32 %v821, 5.0
        %v894 = vadd.f32 %v822, 5.0
        %v895 = vadd.f32 %v823, 5.0
        %v896 = vadd.f32 %v824, 5.0
        %v897 = vmul.f32 %v881, %v889
        %v898 = vmul.f32 %v882, %v890
        %v899 = vmul.f32 %v883, %v891
        %v900 = vmul.f32 %v884, %v892
        %v901 = vmul.f32 %v885, %v893
        %v902 = vmul.f32 %v886, %v894
        %v903 = vmul.f32 %v887, %v895
        %v904 = vmul.f32 %v888, %v896
        %v905 = vadd.f32 %v817, 6.0
        %v906 = vadd.f32 %v818, 6.0
        %v907 = vadd.f32 %v819, 6.0
        %v908 = vadd.f32 %v820, 6.0
        %v909 = vadd.f32 %v821, 6.0
        %v910 = vadd.f32 %v822, 6.0
        %v911 = vadd.f32 %v823, 6.0
        %v912 = vadd.f32 %v824, 6.0
        %v913 = vmul.f32 %v897, %v905
        %v914 = vmul.f32 %v898, %v906
        %v915 = vmul.f32 %v899, %v907
        %v916 = vmul.f32 %v900, %v908
        %v917 = vmul.f32 %v901, %v909
        %v918 = vmul.f32 %v902, %v910
        %v919 = vmul.f32 %v903, %v911
        %v920 = vmul.f32 %v904, %v912
        %v921 = vadd.f32 %v817, 7.0
        %v922 = vadd.f32 %v818, 7.0
        %v923 = vadd.f32 %v819, 7.0
        %v924 = vadd.f32 %v820, 7.0
        %v925 = vadd.f32 %v821, 7.0
        %v926 = vadd.f32 %v822, 7.0
        %v927 = vadd.f32 %v823, 7.0
        %v928 = vadd.f32 %v824, 7.0
        %v929 = vmul.f32 %v913, %v921
        %v930 = vmul.f32 %v914, %v922
        %v931 = vmul.f32 %v915, %v923
        %v932 = vmul.f32 %v916, %v924
        %v933 = vmul.f32 %v917, %v925
        %v934 = vmul.f32 %v918, %v926
        %v935 = vmul.f32 %v919, %v927
        %v936 = vmul.f32 %v920, %v928
        %v937 = vlog2.pop %v929
        %v938 = vmul.f32 %v937, 0.6931472
        %v939 = vlog2.pop %v930
        %v940 = vmul.f32 %v939, 0.6931472
        %v941 = vlog2.pop %v931
        %v942 = vmul.f32 %v941, 0.6931472
        %v943 = vlog2.pop %v932
        %v944 = vmul.f32 %v943, 0.6931472
        %v945 = vlog2.pop %v933
        %v946 = vmul.f32 %v945, 0.6931472
        %v947 = vlog2.pop %v934
        %v948 = vmul.f32 %v947, 0.6931472
        %v949 = vlog2.pop %v935
        %v950 = vmul.f32 %v949, 0.6931472
        %v951 = vlog2.pop %v936
        %v952 = vmul.f32 %v951, 0.6931472
        %v953 = vsel %vm809, %v938, 0.0
        %v954 = vsel %vm810, %v940, 0.0
        %v955 = vsel %vm811, %v942, 0.0
        %v956 = vsel %vm812, %v944, 0.0
        %v957 = vsel %vm813, %v946, 0.0
        %v958 = vsel %vm814, %v948, 0.0
        %v959 = vsel %vm815, %v950, 0.0
        %v960 = vsel %vm816, %v952, 0.0
        %v961 = vadd.f32 %v801, 8.0
        %v962 = vadd.f32 %v802, 8.0
        %v963 = vadd.f32 %v803, 8.0
        %v964 = vadd.f32 %v804, 8.0
        %v965 = vadd.f32 %v805, 8.0
        %v966 = vadd.f32 %v806, 8.0
        %v967 = vadd.f32 %v807, 8.0
        %v968 = vadd.f32 %v808, 8.0
        %v969 = vsel %vm809, %v961, %v801
        %v970 = vsel %vm810, %v962, %v802
        %v971 = vsel %vm811, %v963, %v803
        %v972 = vsel %vm812, %v964, %v804
        %v973 = vsel %vm813, %v965, %v805
        %v974 = vsel %vm814, %v966, %v806
        %v975 = vsel %vm815, %v967, %v807
        %v976 = vsel %vm816, %v968, %v808
        %v977 = vrcp.pop %v969
        %v978 = vrcp.pop %v970
        %v979 = vrcp.pop %v971
        %v980 = vrcp.pop %v972
        %v981 = vrcp.pop %v973
        %v982 = vrcp.pop %v974
        %v983 = vrcp.pop %v975
        %v984 = vrcp.pop %v976
        %v985 = vmul.f32 %v977, %v977
        %v986 = vmul.f32 %v978, %v978
        %v987 = vmul.f32 %v979, %v979
        %v988 = vmul.f32 %v980, %v980
        %v989 = vmul.f32 %v981, %v981
        %v990 = vmul.f32 %v982, %v982
        %v991 = vmul.f32 %v983, %v983
        %v992 = vmul.f32 %v984, %v984
        %v993 = vmul.f32 %v985, 0.0007936508
        %v994 = vmul.f32 %v986, 0.0007936508
        %v995 = vmul.f32 %v987, 0.0007936508
        %v996 = vmul.f32 %v988, 0.0007936508
        %v997 = vmul.f32 %v989, 0.0007936508
        %v998 = vmul.f32 %v990, 0.0007936508
        %v999 = vmul.f32 %v991, 0.0007936508
        %v1000 = vmul.f32 %v992, 0.0007936508
        %v1001 = vadd.f32 %v993, -0.0027777778
        %v1002 = vadd.f32 %v994, -0.0027777778
        %v1003 = vadd.f32 %v995, -0.0027777778
        %v1004 = vadd.f32 %v996, -0.0027777778
        %v1005 = vadd.f32 %v997, -0.0027777778
        %v1006 = vadd.f32 %v998, -0.0027777778
        %v1007 = vadd.f32 %v999, -0.0027777778
        %v1008 = vadd.f32 %v1000, -0.0027777778
        %v1009 = vmul.f32 %v985, %v1001
        %v1010 = vmul.f32 %v986, %v1002
        %v1011 = vmul.f32 %v987, %v1003
        %v1012 = vmul.f32 %v988, %v1004
        %v1013 = vmul.f32 %v989, %v1005
        %v1014 = vmul.f32 %v990, %v1006
        %v1015 = vmul.f32 %v991, %v1007
        %v1016 = vmul.f32 %v992, %v1008
        %v1017 = vadd.f32 %v1009, 0.083333336
        %v1018 = vadd.f32 %v1010, 0.083333336
        %v1019 = vadd.f32 %v1011, 0.083333336
        %v1020 = vadd.f32 %v1012, 0.083333336
        %v1021 = vadd.f32 %v1013, 0.083333336
        %v1022 = vadd.f32 %v1014, 0.083333336
        %v1023 = vadd.f32 %v1015, 0.083333336
        %v1024 = vadd.f32 %v1016, 0.083333336
        %v1025 = vmul.f32 %v977, %v1017
        %v1026 = vmul.f32 %v978, %v1018
        %v1027 = vmul.f32 %v979, %v1019
        %v1028 = vmul.f32 %v980, %v1020
        %v1029 = vmul.f32 %v981, %v1021
        %v1030 = vmul.f32 %v982, %v1022
        %v1031 = vmul.f32 %v983, %v1023
        %v1032 = vmul.f32 %v984, %v1024
        %v1033 = vsub.f32 %v969, 0.5
        %v1034 = vsub.f32 %v970, 0.5
        %v1035 = vsub.f32 %v971, 0.5
        %v1036 = vsub.f32 %v972, 0.5
        %v1037 = vsub.f32 %v973, 0.5
        %v1038 = vsub.f32 %v974, 0.5
        %v1039 = vsub.f32 %v975, 0.5
        %v1040 = vsub.f32 %v976, 0.5
        %v1041 = vlog2.pop %v969
        %v1042 = vmul.f32 %v1041, 0.6931472
        %v1043 = vlog2.pop %v970
        %v1044 = vmul.f32 %v1043, 0.6931472
        %v1045 = vlog2.pop %v971
        %v1046 = vmul.f32 %v1045, 0.6931472
        %v1047 = vlog2.pop %v972
        %v1048 = vmul.f32 %v1047, 0.6931472
        %v1049 = vlog2.pop %v973
        %v1050 = vmul.f32 %v1049, 0.6931472
        %v1051 = vlog2.pop %v974
        %v1052 = vmul.f32 %v1051, 0.6931472
        %v1053 = vlog2.pop %v975
        %v1054 = vmul.f32 %v1053, 0.6931472
        %v1055 = vlog2.pop %v976
        %v1056 = vmul.f32 %v1055, 0.6931472
        %v1057 = vmul.f32 %v1033, %v1042
        %v1058 = vmul.f32 %v1034, %v1044
        %v1059 = vmul.f32 %v1035, %v1046
        %v1060 = vmul.f32 %v1036, %v1048
        %v1061 = vmul.f32 %v1037, %v1050
        %v1062 = vmul.f32 %v1038, %v1052
        %v1063 = vmul.f32 %v1039, %v1054
        %v1064 = vmul.f32 %v1040, %v1056
        %v1065 = vsub.f32 %v1057, %v969
        %v1066 = vsub.f32 %v1058, %v970
        %v1067 = vsub.f32 %v1059, %v971
        %v1068 = vsub.f32 %v1060, %v972
        %v1069 = vsub.f32 %v1061, %v973
        %v1070 = vsub.f32 %v1062, %v974
        %v1071 = vsub.f32 %v1063, %v975
        %v1072 = vsub.f32 %v1064, %v976
        %v1073 = vadd.f32 %v1065, 0.9189385
        %v1074 = vadd.f32 %v1066, 0.9189385
        %v1075 = vadd.f32 %v1067, 0.9189385
        %v1076 = vadd.f32 %v1068, 0.9189385
        %v1077 = vadd.f32 %v1069, 0.9189385
        %v1078 = vadd.f32 %v1070, 0.9189385
        %v1079 = vadd.f32 %v1071, 0.9189385
        %v1080 = vadd.f32 %v1072, 0.9189385
        %v1081 = vadd.f32 %v1073, %v1025
        %v1082 = vadd.f32 %v1074, %v1026
        %v1083 = vadd.f32 %v1075, %v1027
        %v1084 = vadd.f32 %v1076, %v1028
        %v1085 = vadd.f32 %v1077, %v1029
        %v1086 = vadd.f32 %v1078, %v1030
        %v1087 = vadd.f32 %v1079, %v1031
        %v1088 = vadd.f32 %v1080, %v1032
        %v1089 = vsub.f32 %v1081, %v953
        %v1090 = vsub.f32 %v1082, %v954
        %v1091 = vsub.f32 %v1083, %v955
        %v1092 = vsub.f32 %v1084, %v956
        %v1093 = vsub.f32 %v1085, %v957
        %v1094 = vsub.f32 %v1086, %v958
        %v1095 = vsub.f32 %v1087, %v959
        %v1096 = vsub.f32 %v1088, %v960
        %v1097 = vadd.f32 %v793, %v1089
        %v1098 = vadd.f32 %v794, %v1090
        %v1099 = vadd.f32 %v795, %v1091
        %v1100 = vadd.f32 %v796, %v1092
        %v1101 = vadd.f32 %v797, %v1093
        %v1102 = vadd.f32 %v798, %v1094
        %v1103 = vadd.f32 %v799, %v1095
        %v1104 = vadd.f32 %v800, %v1096
        %v1105 = vadd.f32 %v473, %v489
        %v1106 = vadd.f32 %v474, %v490
        %v1107 = vadd.f32 %v475, %v491
        %v1108 = vadd.f32 %v476, %v492
        %v1109 = vadd.f32 %v477, %v493
        %v1110 = vadd.f32 %v478, %v494
        %v1111 = vadd.f32 %v479, %v495
        %v1112 = vadd.f32 %v480, %v496
        %v1113 = vadd.f32 %v1105, 1e-10
        %v1114 = vadd.f32 %v1106, 1e-10
        %v1115 = vadd.f32 %v1107, 1e-10
        %v1116 = vadd.f32 %v1108, 1e-10
        %v1117 = vadd.f32 %v1109, 1e-10
        %v1118 = vadd.f32 %v1110, 1e-10
        %v1119 = vadd.f32 %v1111, 1e-10
        %v1120 = vadd.f32 %v1112, 1e-10
        %vm1121 = vcmp.lt.f32.partialorder %v1113, 8.0
        %vm1122 = vcmp.lt.f32.partialorder %v1114, 8.0
        %vm1123 = vcmp.lt.f32.partialorder %v1115, 8.0
        %vm1124 = vcmp.lt.f32.partialorder %v1116, 8.0
        %vm1125 = vcmp.lt.f32.partialorder %v1117, 8.0
        %vm1126 = vcmp.lt.f32.partialorder %v1118, 8.0
        %vm1127 = vcmp.lt.f32.partialorder %v1119, 8.0
        %vm1128 = vcmp.lt.f32.partialorder %v1120, 8.0
        %v1129 = vmin.f32 %v1113, 8.0
        %v1130 = vmin.f32 %v1114, 8.0
        %v1131 = vmin.f32 %v1115, 8.0
        %v1132 = vmin.f32 %v1116, 8.0
        %v1133 = vmin.f32 %v1117, 8.0
        %v1134 = vmin.f32 %v1118, 8.0
        %v1135 = vmin.f32 %v1119, 8.0
        %v1136 = vmin.f32 %v1120, 8.0
        %v1137 = vadd.f32 %v1129, 1.0
        %v1138 = vadd.f32 %v1130, 1.0
        %v1139 = vadd.f32 %v1131, 1.0
        %v1140 = vadd.f32 %v1132, 1.0
        %v1141 = vadd.f32 %v1133, 1.0
        %v1142 = vadd.f32 %v1134, 1.0
        %v1143 = vadd.f32 %v1135, 1.0
        %v1144 = vadd.f32 %v1136, 1.0
        %v1145 = vmul.f32 %v1129, %v1137
        %v1146 = vmul.f32 %v1130, %v1138
        %v1147 = vmul.f32 %v1131, %v1139
        %v1148 = vmul.f32 %v1132, %v1140
        %v1149 = vmul.f32 %v1133, %v1141
        %v1150 = vmul.f32 %v1134, %v1142
        %v1151 = vmul.f32 %v1135, %v1143
        %v1152 = vmul.f32 %v1136, %v1144
        %v1153 = vadd.f32 %v1129, 2.0
        %v1154 = vadd.f32 %v1130, 2.0
        %v1155 = vadd.f32 %v1131, 2.0
        %v1156 = vadd.f32 %v1132, 2.0
        %v1157 = vadd.f32 %v1133, 2.0
        %v1158 = vadd.f32 %v1134, 2.0
        %v1159 = vadd.f32 %v1135, 2.0
        %v1160 = vadd.f32 %v1136, 2.0
        %v1161 = vmul.f32 %v1145, %v1153
        %v1162 = vmul.f32 %v1146, %v1154
        %v1163 = vmul.f32 %v1147, %v1155
        %v1164 = vmul.f32 %v1148, %v1156
        %v1165 = vmul.f32 %v1149, %v1157
        %v1166 = vmul.f32 %v1150, %v1158
        %v1167 = vmul.f32 %v1151, %v1159
        %v1168 = vmul.f32 %v1152, %v1160
        %v1169 = vadd.f32 %v1129, 3.0
        %v1170 = vadd.f32 %v1130, 3.0
        %v1171 = vadd.f32 %v1131, 3.0
        %v1172 = vadd.f32 %v1132, 3.0
        %v1173 = vadd.f32 %v1133, 3.0
        %v1174 = vadd.f32 %v1134, 3.0
        %v1175 = vadd.f32 %v1135, 3.0
        %v1176 = vadd.f32 %v1136, 3.0
        %v1177 = vmul.f32 %v1161, %v1169
        %v1178 = vmul.f32 %v1162, %v1170
        %v1179 = vmul.f32 %v1163, %v1171
        %v1180 = vmul.f32 %v1164, %v1172
        %v1181 = vmul.f32 %v1165, %v1173
        %v1182 = vmul.f32 %v1166, %v1174
        %v1183 = vmul.f32 %v1167, %v1175
        %v1184 = vmul.f32 %v1168, %v1176
        %v1185 = vadd.f32 %v1129, 4.0
        %v1186 = vadd.f32 %v1130, 4.0
        %v1187 = vadd.f32 %v1131, 4.0
        %v1188 = vadd.f32 %v1132, 4.0
        %v1189 = vadd.f32 %v1133, 4.0
        %v1190 = vadd.f32 %v1134, 4.0
        %v1191 = vadd.f32 %v1135, 4.0
        %v1192 = vadd.f32 %v1136, 4.0
        %v1193 = vmul.f32 %v1177, %v1185
        %v1194 = vmul.f32 %v1178, %v1186
        %v1195 = vmul.f32 %v1179, %v1187
        %v1196 = vmul.f32 %v1180, %v1188
        %v1197 = vmul.f32 %v1181, %v1189
        %v1198 = vmul.f32 %v1182, %v1190
        %v1199 = vmul.f32 %v1183, %v1191
        %v1200 = vmul.f32 %v1184, %v1192
        %v1201 = vadd.f32 %v1129, 5.0
        %v1202 = vadd.f32 %v1130, 5.0
        %v1203 = vadd.f32 %v1131, 5.0
        %v1204 = vadd.f32 %v1132, 5.0
        %v1205 = vadd.f32 %v1133, 5.0
        %v1206 = vadd.f32 %v1134, 5.0
        %v1207 = vadd.f32 %v1135, 5.0
        %v1208 = vadd.f32 %v1136, 5.0
        %v1209 = vmul.f32 %v1193, %v1201
        %v1210 = vmul.f32 %v1194, %v1202
        %v1211 = vmul.f32 %v1195, %v1203
        %v1212 = vmul.f32 %v1196, %v1204
        %v1213 = vmul.f32 %v1197, %v1205
        %v1214 = vmul.f32 %v1198, %v1206
        %v1215 = vmul.f32 %v1199, %v1207
        %v1216 = vmul.f32 %v1200, %v1208
        %v1217 = vadd.f32 %v1129, 6.0
        %v1218 = vadd.f32 %v1130, 6.0
        %v1219 = vadd.f32 %v1131, 6.0
        %v1220 = vadd.f32 %v1132, 6.0
        %v1221 = vadd.f32 %v1133, 6.0
        %v1222 = vadd.f32 %v1134, 6.0
        %v1223 = vadd.f32 %v1135, 6.0
        %v1224 = vadd.f32 %v1136, 6.0
        %v1225 = vmul.f32 %v1209, %v1217
        %v1226 = vmul.f32 %v1210, %v1218
        %v1227 = vmul.f32 %v1211, %v1219
        %v1228 = vmul.f32 %v1212, %v1220
        %v1229 = vmul.f32 %v1213, %v1221
        %v1230 = vmul.f32 %v1214, %v1222
        %v1231 = vmul.f32 %v1215, %v1223
        %v1232 = vmul.f32 %v1216, %v1224
        %v1233 = vadd.f32 %v1129, 7.0
        %v1234 = vadd.f32 %v1130, 7.0
        %v1235 = vadd.f32 %v1131, 7.0
        %v1236 = vadd.f32 %v1132, 7.0
        %v1237 = vadd.f32 %v1133, 7.0
        %v1238 = vadd.f32 %v1134, 7.0
        %v1239 = vadd.f32 %v1135, 7.0
        %v1240 = vadd.f32 %v1136, 7.0
        %v1241 = vmul.f32 %v1225, %v1233
        %v1242 = vmul.f32 %v1226, %v1234
        %v1243 = vmul.f32 %v1227, %v1235
        %v1244 = vmul.f32 %v1228, %v1236
        %v1245 = vmul.f32 %v1229, %v1237
        %v1246 = vmul.f32 %v1230, %v1238
        %v1247 = vmul.f32 %v1231, %v1239
        %v1248 = vmul.f32 %v1232, %v1240
        %v1249 = vlog2.pop %v1241
        %v1250 = vmul.f32 %v1249, 0.6931472
        %v1251 = vlog2.pop %v1242
        %v1252 = vmul.f32 %v1251, 0.6931472
        %v1253 = vlog2.pop %v1243
        %v1254 = vmul.f32 %v1253, 0.6931472
        %v1255 = vlog2.pop %v1244
        %v1256 = vmul.f32 %v1255, 0.6931472
        %v1257 = vlog2.pop %v1245
        %v1258 = vmul.f32 %v1257, 0.6931472
        %v1259 = vlog2.pop %v1246
        %v1260 = vmul.f32 %v1259, 0.6931472
        %v1261 = vlog2.pop %v1247
        %v1262 = vmul.f32 %v1261, 0.6931472
        %v1263 = vlog2.pop %v1248
        %v1264 = vmul.f32 %v1263, 0.6931472
        %v1265 = vsel %vm1121, %v1250, 0.0
        %v1266 = vsel %vm1122, %v1252, 0.0
        %v1267 = vsel %vm1123, %v1254, 0.0
        %v1268 = vsel %vm1124, %v1256, 0.0
        %v1269 = vsel %vm1125, %v1258, 0.0
        %v1270 = vsel %vm1126, %v1260, 0.0
        %v1271 = vsel %vm1127, %v1262, 0.0
        %v1272 = vsel %vm1128, %v1264, 0.0
        %v1273 = vadd.f32 %v1113, 8.0
        %v1274 = vadd.f32 %v1114, 8.0
        %v1275 = vadd.f32 %v1115, 8.0
        %v1276 = vadd.f32 %v1116, 8.0
        %v1277 = vadd.f32 %v1117, 8.0
        %v1278 = vadd.f32 %v1118, 8.0
        %v1279 = vadd.f32 %v1119, 8.0
        %v1280 = vadd.f32 %v1120, 8.0
        %v1281 = vsel %vm1121, %v1273, %v1113
        %v1282 = vsel %vm1122, %v1274, %v1114
        %v1283 = vsel %vm1123, %v1275, %v1115
        %v1284 = vsel %vm1124, %v1276, %v1116
        %v1285 = vsel %vm1125, %v1277, %v1117
        %v1286 = vsel %vm1126, %v1278, %v1118
        %v1287 = vsel %vm1127, %v1279, %v1119
        %v1288 = vsel %vm1128, %v1280, %v1120
        %v1289 = vrcp.pop %v1281
        %v1290 = vrcp.pop %v1282
        %v1291 = vrcp.pop %v1283
        %v1292 = vrcp.pop %v1284
        %v1293 = vrcp.pop %v1285
        %v1294 = vrcp.pop %v1286
        %v1295 = vrcp.pop %v1287
        %v1296 = vrcp.pop %v1288
        %v1297 = vmul.f32 %v1289, %v1289
        %v1298 = vmul.f32 %v1290, %v1290
        %v1299 = vmul.f32 %v1291, %v1291
        %v1300 = vmul.f32 %v1292, %v1292
        %v1301 = vmul.f32 %v1293, %v1293
        %v1302 = vmul.f32 %v1294, %v1294
        %v1303 = vmul.f32 %v1295, %v1295
        %v1304 = vmul.f32 %v1296, %v1296
        %v1305 = vmul.f32 %v1297, 0.0007936508
        %v1306 = vmul.f32 %v1298, 0.0007936508
        %v1307 = vmul.f32 %v1299, 0.0007936508
        %v1308 = vmul.f32 %v1300, 0.0007936508
        %v1309 = vmul.f32 %v1301, 0.0007936508
        %v1310 = vmul.f32 %v1302, 0.0007936508
        %v1311 = vmul.f32 %v1303, 0.0007936508
        %v1312 = vmul.f32 %v1304, 0.0007936508
        %v1313 = vadd.f32 %v1305, -0.0027777778
        %v1314 = vadd.f32 %v1306, -0.0027777778
        %v1315 = vadd.f32 %v1307, -0.0027777778
        %v1316 = vadd.f32 %v1308, -0.0027777778
        %v1317 = vadd.f32 %v1309, -0.0027777778
        %v1318 = vadd.f32 %v1310, -0.0027777778
        %v1319 = vadd.f32 %v1311, -0.0027777778
        %v1320 = vadd.f32 %v1312, -0.0027777778
        %v1321 = vmul.f32 %v1297, %v1313
        %v1322 = vmul.f32 %v1298, %v1314
        %v1323 = vmul.f32 %v1299, %v1315
        %v1324 = vmul.f32 %v1300, %v1316
        %v1325 = vmul.f32 %v1301, %v1317
        %v1326 = vmul.f32 %v1302, %v1318
        %v1327 = vmul.f32 %v1303, %v1319
        %v1328 = vmul.f32 %v1304, %v1320
        %v1329 = vadd.f32 %v1321, 0.083333336
        %v1330 = vadd.f32 %v1322, 0.083333336
        %v1331 = vadd.f32 %v1323, 0.083333336
        %v1332 = vadd.f32 %v1324, 0.083333336
        %v1333 = vadd.f32 %v1325, 0.083333336
        %v1334 = vadd.f32 %v1326, 0.083333336
        %v1335 = vadd.f32 %v1327, 0.083333336
        %v1336 = vadd.f32 %v1328, 0.083333336
        %v1337 = vmul.f32 %v1289, %v1329
        %v1338 = vmul.f32 %v1290, %v1330
        %v1339 = vmul.f32 %v1291, %v1331
        %v1340 = vmul.f32 %v1292, %v1332
        %v1341 = vmul.f32 %v1293, %v1333
        %v1342 = vmul.f32 %v1294, %v1334
        %v1343 = vmul.f32 %v1295, %v1335
        %v1344 = vmul.f32 %v1296, %v1336
        %v1345 = vsub.f32 %v1281, 0.5
        %v1346 = vsub.f32 %v1282, 0.5
        %v1347 = vsub.f32 %v1283, 0.5
        %v1348 = vsub.f32 %v1284, 0.5
        %v1349 = vsub.f32 %v1285, 0.5
        %v1350 = vsub.f32 %v1286, 0.5
        %v1351 = vsub.f32 %v1287, 0.5
        %v1352 = vsub.f32 %v1288, 0.5
        %v1353 = vlog2.pop %v1281
        %v1354 = vmul.f32 %v1353, 0.6931472
        %v1355 = vlog2.pop %v1282
        %v1356 = vmul.f32 %v1355, 0.6931472
        %v1357 = vlog2.pop %v1283
        %v1358 = vmul.f32 %v1357, 0.6931472
        %v1359 = vlog2.pop %v1284
        %v1360 = vmul.f32 %v1359, 0.6931472
        %v1361 = vlog2.pop %v1285
        %v1362 = vmul.f32 %v1361, 0.6931472
        %v1363 = vlog2.pop %v1286
        %v1364 = vmul.f32 %v1363, 0.6931472
        %v1365 = vlog2.pop %v1287
        %v1366 = vmul.f32 %v1365, 0.6931472
        %v1367 = vlog2.pop %v1288
        %v1368 = vmul.f32 %v1367, 0.6931472
        %v1369 = vmul.f32 %v1345, %v1354
        %v1370 = vmul.f32 %v1346, %v1356
        %v1371 = vmul.f32 %v1347, %v1358
        %v1372 = vmul.f32 %v1348, %v1360
        %v1373 = vmul.f32 %v1349, %v1362
        %v1374 = vmul.f32 %v1350, %v1364
        %v1375 = vmul.f32 %v1351, %v1366
        %v1376 = vmul.f32 %v1352, %v1368
        %v1377 = vsub.f32 %v1369, %v1281
        %v1378 = vsub.f32 %v1370, %v1282
        %v1379 = vsub.f32 %v1371, %v1283
        %v1380 = vsub.f32 %v1372, %v1284
        %v1381 = vsub.f32 %v1373, %v1285
        %v1382 = vsub.f32 %v1374, %v1286
        %v1383 = vsub.f32 %v1375, %v1287
        %v1384 = vsub.f32 %v1376, %v1288
        %v1385 = vadd.f32 %v1377, 0.9189385
        %v1386 = vadd.f32 %v1378, 0.9189385
        %v1387 = vadd.f32 %v1379, 0.9189385
        %v1388 = vadd.f32 %v1380, 0.9189385
        %v1389 = vadd.f32 %v1381, 0.9189385
        %v1390 = vadd.f32 %v1382, 0.9189385
        %v1391 = vadd.f32 %v1383, 0.9189385
        %v1392 = vadd.f32 %v1384, 0.9189385
        %v1393 = vadd.f32 %v1385, %v1337
        %v1394 = vadd.f32 %v1386, %v1338
        %v1395 = vadd.f32 %v1387, %v1339
        %v1396 = vadd.f32 %v1388, %v1340
        %v1397 = vadd.f32 %v1389, %v1341
        %v1398 = vadd.f32 %v1390, %v1342
        %v1399 = vadd.f32 %v1391, %v1343
        %v1400 = vadd.f32 %v1392, %v1344
        %v1401 = vsub.f32 %v1393, %v1265
        %v1402 = vsub.f32 %v1394, %v1266
        %v1403 = vsub.f32 %v1395, %v1267
        %v1404 = vsub.f32 %v1396, %v1268
        %v1405 = vsub.f32 %v1397, %v1269
        %v1406 = vsub.f32 %v1398, %v1270
        %v1407 = vsub.f32 %v1399, %v1271
        %v1408 = vsub.f32 %v1400, %v1272
        %v1409 = vsub.f32 %v1097, %v1401
        %v1410 = vsub.f32 %v1098, %v1402
        %v1411 = vsub.f32 %v1099, %v1403
        %v1412 = vsub.f32 %v1100, %v1404
        %v1413 = vsub.f32 %v1101, %v1405
        %v1414 = vsub.f32 %v1102, %v1406
        %v1415 = vsub.f32 %v1103, %v1407
        %v1416 = vsub.f32 %v1104, %v1408
        %v1417 = vlog2.pop %v505
        %v1418 = vmul.f32 %v1417, 0.6931472
        %v1419 = vlog2.pop %v506
        %v1420 = vmul.f32 %v1419, 0.6931472
        %v1421 = vlog2.pop %v507
        %v1422 = vmul.f32 %v1421, 0.6931472
        %v1423 = vlog2.pop %v508
        %v1424 = vmul.f32 %v1423, 0.6931472
        %v1425 = vlog2.pop %v509
        %v1426 = vmul.f32 %v1425, 0.6931472
        %v1427 = vlog2.pop %v510
        %v1428 = vmul.f32 %v1427, 0.6931472
        %v1429 = vlog2.pop %v511
        %v1430 = vmul.f32 %v1429, 0.6931472
        %v1431 = vlog2.pop %v512
        %v1432 = vmul.f32 %v1431, 0.6931472
        %v1433 = vmul.f32 %v489, %v1418
        %v1434 = vmul.f32 %v490, %v1420
        %v1435 = vmul.f32 %v491, %v1422
        %v1436 = vmul.f32 %v492, %v1424
        %v1437 = vmul.f32 %v493, %v1426
        %v1438 = vmul.f32 %v494, %v1428
        %v1439 = vmul.f32 %v495, %v1430
        %v1440 = vmul.f32 %v496, %v1432
        %v1441 = vsub.f32 %v1409, %v1433
        %v1442 = vsub.f32 %v1410, %v1434
        %v1443 = vsub.f32 %v1411, %v1435
        %v1444 = vsub.f32 %v1412, %v1436
        %v1445 = vsub.f32 %v1413, %v1437
        %v1446 = vsub.f32 %v1414, %v1438
        %v1447 = vsub.f32 %v1415, %v1439
        %v1448 = vsub.f32 %v1416, %v1440
        %v1449 = vadd.f32 %v481, 1e-10
        %v1450 = vadd.f32 %v482, 1e-10
        %v1451 = vadd.f32 %v483, 1e-10
        %v1452 = vadd.f32 %v484, 1e-10
        %v1453 = vadd.f32 %v485, 1e-10
        %v1454 = vadd.f32 %v486, 1e-10
        %v1455 = vadd.f32 %v487, 1e-10
        %v1456 = vadd.f32 %v488, 1e-10
        %v1457 = vlog2.pop %v1449
        %v1458 = vmul.f32 %v1457, 0.6931472
        %v1459 = vlog2.pop %v1450
        %v1460 = vmul.f32 %v1459, 0.6931472
        %v1461 = vlog2.pop %v1451
        %v1462 = vmul.f32 %v1461, 0.6931472
        %v1463 = vlog2.pop %v1452
        %v1464 = vmul.f32 %v1463, 0.6931472
        %v1465 = vlog2.pop %v1453
        %v1466 = vmul.f32 %v1465, 0.6931472
        %v1467 = vlog2.pop %v1454
        %v1468 = vmul.f32 %v1467, 0.6931472
        %v1469 = vlog2.pop %v1455
        %v1470 = vmul.f32 %v1469, 0.6931472
        %v1471 = vlog2.pop %v1456
        %v1472 = vmul.f32 %v1471, 0.6931472
        %v1473 = vmul.f32 %v473, %v1458
        %v1474 = vmul.f32 %v474, %v1460
        %v1475 = vmul.f32 %v475, %v1462
        %v1476 = vmul.f32 %v476, %v1464
        %v1477 = vmul.f32 %v477, %v1466
        %v1478 = vmul.f32 %v478, %v1468
        %v1479 = vmul.f32 %v479, %v1470
        %v1480 = vmul.f32 %v480, %v1472
        %v1481 = vsub.f32 %v1441, %v1473
        %v1482 = vsub.f32 %v1442, %v1474
        %v1483 = vsub.f32 %v1443, %v1475
        %v1484 = vsub.f32 %v1444, %v1476
        %v1485 = vsub.f32 %v1445, %v1477
        %v1486 = vsub.f32 %v1446, %v1478
        %v1487 = vsub.f32 %v1447, %v1479
        %v1488 = vsub.f32 %v1448, %v1480
        %v1489 = vadd.f32 %v489, %v481
        %v1490 = vadd.f32 %v490, %v482
        %v1491 = vadd.f32 %v491, %v483
        %v1492 = vadd.f32 %v492, %v484
        %v1493 = vadd.f32 %v493, %v485
        %v1494 = vadd.f32 %v494, %v486
        %v1495 = vadd.f32 %v495, %v487
        %v1496 = vadd.f32 %v496, %v488
        %v1497 = vadd.f32 %v1489, 1e-10
        %v1498 = vadd.f32 %v1490, 1e-10
        %v1499 = vadd.f32 %v1491, 1e-10
        %v1500 = vadd.f32 %v1492, 1e-10
        %v1501 = vadd.f32 %v1493, 1e-10
        %v1502 = vadd.f32 %v1494, 1e-10
        %v1503 = vadd.f32 %v1495, 1e-10
        %v1504 = vadd.f32 %v1496, 1e-10
        %v1505 = vlog2.pop %v1497
        %v1506 = vmul.f32 %v1505, 0.6931472
        %v1507 = vlog2.pop %v1498
        %v1508 = vmul.f32 %v1507, 0.6931472
        %v1509 = vlog2.pop %v1499
        %v1510 = vmul.f32 %v1509, 0.6931472
        %v1511 = vlog2.pop %v1500
        %v1512 = vmul.f32 %v1511, 0.6931472
        %v1513 = vlog2.pop %v1501
        %v1514 = vmul.f32 %v1513, 0.6931472
        %v1515 = vlog2.pop %v1502
        %v1516 = vmul.f32 %v1515, 0.6931472
        %v1517 = vlog2.pop %v1503
        %v1518 = vmul.f32 %v1517, 0.6931472
        %v1519 = vlog2.pop %v1504
        %v1520 = vmul.f32 %v1519, 0.6931472
        %v1521 = vmul.f32 %v1105, %v1506
        %v1522 = vmul.f32 %v1106, %v1508
        %v1523 = vmul.f32 %v1107, %v1510
        %v1524 = vmul.f32 %v1108, %v1512
        %v1525 = vmul.f32 %v1109, %v1514
        %v1526 = vmul.f32 %v1110, %v1516
        %v1527 = vmul.f32 %v1111, %v1518
        %v1528 = vmul.f32 %v1112, %v1520
        %v1529 = vadd.f32 %v1481, %v1521
        %v1530 = vadd.f32 %v1482, %v1522
        %v1531 = vadd.f32 %v1483, %v1523
        %v1532 = vadd.f32 %v1484, %v1524
        %v1533 = vadd.f32 %v1485, %v1525
        %v1534 = vadd.f32 %v1486, %v1526
        %v1535 = vadd.f32 %v1487, %v1527
        %v1536 = vadd.f32 %v1488, %v1528
        %v1537 = vsub.f32 1.0, %v497
        %v1538 = vsub.f32 1.0, %v498
        %v1539 = vsub.f32 1.0, %v499
        %v1540 = vsub.f32 1.0, %v500
        %v1541 = vsub.f32 1.0, %v501
        %v1542 = vsub.f32 1.0, %v502
        %v1543 = vsub.f32 1.0, %v503
        %v1544 = vsub.f32 1.0, %v504
        %v1545 = vsub.f32 0.0, %v1529
        %v1546 = vsub.f32 0.0, %v1530
        %v1547 = vsub.f32 0.0, %v1531
        %v1548 = vsub.f32 0.0, %v1532
        %v1549 = vsub.f32 0.0, %v1533
        %v1550 = vsub.f32 0.0, %v1534
        %v1551 = vsub.f32 0.0, %v1535
        %v1552 = vsub.f32 0.0, %v1536
        %v1553 = vmul.f32 %v1545, 1.442695
        %v1554 = vpow.pop %v1553
        %v1555 = vmul.f32 %v1546, 1.442695
        %v1556 = vpow.pop %v1555
        %v1557 = vmul.f32 %v1547, 1.442695
        %v1558 = vpow.pop %v1557
        %v1559 = vmul.f32 %v1548, 1.442695
        %v1560 = vpow.pop %v1559
        %v1561 = vmul.f32 %v1549, 1.442695
        %v1562 = vpow.pop %v1561
        %v1563 = vmul.f32 %v1550, 1.442695
        %v1564 = vpow.pop %v1563
        %v1565 = vmul.f32 %v1551, 1.442695
        %v1566 = vpow.pop %v1565
        %v1567 = vmul.f32 %v1552, 1.442695
        %v1568 = vpow.pop %v1567
        %v1569 = vmul.f32 %v1537, %v1554
        %v1570 = vmul.f32 %v1538, %v1556
        %v1571 = vmul.f32 %v1539, %v1558
        %v1572 = vmul.f32 %v1540, %v1560
        %v1573 = vmul.f32 %v1541, %v1562
        %v1574 = vmul.f32 %v1542, %v1564
        %v1575 = vmul.f32 %v1543, %v1566
        %v1576 = vmul.f32 %v1544, %v1568
        %v1577 = vadd.f32 %v497, %v1569
        %v1578 = vadd.f32 %v498, %v1570
        %v1579 = vadd.f32 %v499, %v1571
        %v1580 = vadd.f32 %v500, %v1572
        %v1581 = vadd.f32 %v501, %v1573
        %v1582 = vadd.f32 %v502, %v1574
        %v1583 = vadd.f32 %v503, %v1575
        %v1584 = vadd.f32 %v504, %v1576
        %v1585 = vadd.f32 %v1577, 1e-10
        %v1586 = vadd.f32 %v1578, 1e-10
        %v1587 = vadd.f32 %v1579, 1e-10
        %v1588 = vadd.f32 %v1580, 1e-10
        %v1589 = vadd.f32 %v1581, 1e-10
        %v1590 = vadd.f32 %v1582, 1e-10
        %v1591 = vadd.f32 %v1583, 1e-10
        %v1592 = vadd.f32 %v1584, 1e-10
        %v1593 = vlog2.pop %v1585
        %v1594 = vmul.f32 %v1593, 0.6931472
        %v1595 = vlog2.pop %v1586
        %v1596 = vmul.f32 %v1595, 0.6931472
        %v1597 = vlog2.pop %v1587
        %v1598 = vmul.f32 %v1597, 0.6931472
        %v1599 = vlog2.pop %v1588
        %v1600 = vmul.f32 %v1599, 0.6931472
        %v1601 = vlog2.pop %v1589
        %v1602 = vmul.f32 %v1601, 0.6931472
        %v1603 = vlog2.pop %v1590
        %v1604 = vmul.f32 %v1603, 0.6931472
        %v1605 = vlog2.pop %v1591
        %v1606 = vmul.f32 %v1605, 0.6931472
        %v1607 = vlog2.pop %v1592
        %v1608 = vmul.f32 %v1607, 0.6931472
        %v1609 = vsub.f32 0.0, %v1594
        %v1610 = vsub.f32 0.0, %v1596
        %v1611 = vsub.f32 0.0, %v1598
        %v1612 = vsub.f32 0.0, %v1600
        %v1613 = vsub.f32 0.0, %v1602
        %v1614 = vsub.f32 0.0, %v1604
        %v1615 = vsub.f32 0.0, %v1606
        %v1616 = vsub.f32 0.0, %v1608
        %vm1617 = vcmp.lt.f32.partialorder %v473, 1e-08
        %vm1618 = vcmp.lt.f32.partialorder %v474, 1e-08
        %vm1619 = vcmp.lt.f32.partialorder %v475, 1e-08
        %vm1620 = vcmp.lt.f32.partialorder %v476, 1e-08
        %vm1621 = vcmp.lt.f32.partialorder %v477, 1e-08
        %vm1622 = vcmp.lt.f32.partialorder %v478, 1e-08
        %vm1623 = vcmp.lt.f32.partialorder %v479, 1e-08
        %vm1624 = vcmp.lt.f32.partialorder %v480, 1e-08
        %v1625 = vadd.f32 %v1537, 1e-10
        %v1626 = vadd.f32 %v1538, 1e-10
        %v1627 = vadd.f32 %v1539, 1e-10
        %v1628 = vadd.f32 %v1540, 1e-10
        %v1629 = vadd.f32 %v1541, 1e-10
        %v1630 = vadd.f32 %v1542, 1e-10
        %v1631 = vadd.f32 %v1543, 1e-10
        %v1632 = vadd.f32 %v1544, 1e-10
        %v1633 = vlog2.pop %v1625
        %v1634 = vmul.f32 %v1633, 0.6931472
        %v1635 = vlog2.pop %v1626
        %v1636 = vmul.f32 %v1635, 0.6931472
        %v1637 = vlog2.pop %v1627
        %v1638 = vmul.f32 %v1637, 0.6931472
        %v1639 = vlog2.pop %v1628
        %v1640 = vmul.f32 %v1639, 0.6931472
        %v1641 = vlog2.pop %v1629
        %v1642 = vmul.f32 %v1641, 0.6931472
        %v1643 = vlog2.pop %v1630
        %v1644 = vmul.f32 %v1643, 0.6931472
        %v1645 = vlog2.pop %v1631
        %v1646 = vmul.f32 %v1645, 0.6931472
        %v1647 = vlog2.pop %v1632
        %v1648 = vmul.f32 %v1647, 0.6931472
        %v1649 = vsub.f32 0.0, %v1634
        %v1650 = vsub.f32 0.0, %v1636
        %v1651 = vsub.f32 0.0, %v1638
        %v1652 = vsub.f32 0.0, %v1640
        %v1653 = vsub.f32 0.0, %v1642
        %v1654 = vsub.f32 0.0, %v1644
        %v1655 = vsub.f32 0.0, %v1646
        %v1656 = vsub.f32 0.0, %v1648
        %v1657 = vadd.f32 %v1649, %v1529
        %v1658 = vadd.f32 %v1650, %v1530
        %v1659 = vadd.f32 %v1651, %v1531
        %v1660 = vadd.f32 %v1652, %v1532
        %v1661 = vadd.f32 %v1653, %v1533
        %v1662 = vadd.f32 %v1654, %v1534
        %v1663 = vadd.f32 %v1655, %v1535
        %v1664 = vadd.f32 %v1656, %v1536
        %v1665 = vsel %vm1617, %v1609, %v1657
        %v1666 = vsel %vm1618, %v1610, %v1658
        %v1667 = vsel %vm1619, %v1611, %v1659
        %v1668 = vsel %vm1620, %v1612, %v1660
        %v1669 = vsel %vm1621, %v1613, %v1661
        %v1670 = vsel %vm1622, %v1614, %v1662
        %v1671 = vsel %vm1623, %v1615, %v1663
        %v1672 = vsel %vm1624, %v1616, %v1664
        %v1673 = vmul.f32 %v497, %v497
        %v1674 = vmul.f32 %v498, %v498
        %v1675 = vmul.f32 %v499, %v499
        %v1676 = vmul.f32 %v500, %v500
        %v1677 = vmul.f32 %v501, %v501
        %v1678 = vmul.f32 %v502, %v502
        %v1679 = vmul.f32 %v503, %v503
        %v1680 = vmul.f32 %v504, %v504
        %p1681 = scmp.lt.s32.totalorder %s31, 3
        // Predicated region
        $region57: #{zinb_loss.1} parent=35 // pred_check
          %p1682 = pneg %p1681
        $region58: #{zinb_loss.1} parent=35 // pred_check_branch
          %1684 = sbr.rel (%p1682) target = $region60
        $region59: #{zinb_loss.1} parent=35 // pred_region
          %v1685 = vld [vmem:[%s457] sm:$0xff]
          %v1686 = vld [vmem:[%s457 + $0x8] sm:$0xff]
          %v1687 = vadd.f32 %v1665, %v1667
          %v1688 = vadd.f32 %v1666, %v1668
          %v1689 = vadd.f32 %v1687, %v1669
          %v1690 = vadd.f32 %v1688, %v1670
          %v1691 = vadd.f32 %v1689, %v1671
          %v1692 = vadd.f32 %v1690, %v1672
          %v1693 = vadd.f32 %v1685, %v1691
          %v1694 = vadd.f32 %v1686, %v1692
          %1695 = vst [vmem:[%s457] sm:$0xff] %v1693
          %1696 = vst [vmem:[%s457 + $0x8] sm:$0xff] %v1694
          %v1697 = vld [vmem:[%s463] sm:$0xff]
          %v1698 = vld [vmem:[%s463 + $0x8] sm:$0xff]
          %v1699 = vadd.f32 %v1673, %v1675
          %v1700 = vadd.f32 %v1674, %v1676
          %v1701 = vadd.f32 %v1699, %v1677
          %v1702 = vadd.f32 %v1700, %v1678
          %v1703 = vadd.f32 %v1701, %v1679
          %v1704 = vadd.f32 %v1702, %v1680
          %v1705 = vadd.f32 %v1697, %v1703
          %v1706 = vadd.f32 %v1698, %v1704
          %1707 = vst [vmem:[%s463] sm:$0xff] %v1705
          %1708 = vst [vmem:[%s463 + $0x8] sm:$0xff] %v1706
        $region60: #{zinb_loss.1} parent=35 // pred_fallthru
          _
        %p1709 = scmp.eq.s32.totalorder %s31, 3
        // Predicated region
        $region61: #{zinb_loss.1} parent=35 // pred_check
          %p1710 = pneg %p1709
        $region62: #{zinb_loss.1} parent=35 // pred_check_branch
          %1712 = sbr.rel (%p1710) target = $region64
        $region63: #{zinb_loss.1} parent=35 // pred_region
          %s1713 = smul.u32 %s31, 32
          %v1714 = vlaneseq
          %v1715 = vshrl.u32 %v1714, 7
          %v1716 = vadd.s32 %v1715, 8
          %v1717 = vadd.s32 %v1715, 16
          %v1718 = vadd.s32 %v1715, 24
          %v1719 = vstv %s1713
          %v1720 = vadd.s32 %v1719, %v1715
          %v1721 = vadd.s32 %v1719, %v1716
          %v1722 = vadd.s32 %v1719, %v1717
          %v1723 = vadd.s32 %v1719, %v1718
          %vm1724 = vcmp.lt.s32.totalorder %v1720, 100
          %vm1725 = vcmp.lt.s32.totalorder %v1721, 100
          %vm1726 = vcmp.lt.s32.totalorder %v1722, 100
          %vm1727 = vcmp.lt.s32.totalorder %v1723, 100
          %v1728 = vsel %vm1724, 1, 0
          %v1729 = vsel %vm1725, 1, 0
          %v1730 = vsel %vm1726, 1, 0
          %v1731 = vsel %vm1727, 1, 0
          %vm1732 = vcmp.eq.s32.totalorder %v1728, 1
          %vm1733 = vcmp.eq.s32.totalorder %v1729, 1
          %vm1734 = vcmp.eq.s32.totalorder %v1730, 1
          %vm1735 = vcmp.eq.s32.totalorder %v1731, 1
          %v1736 = vsel %vm1732, %v1665, 0.0
          %v1737 = vsel %vm1732, %v1666, 0.0
          %v1738 = vsel %vm1733, %v1667, 0.0
          %v1739 = vsel %vm1733, %v1668, 0.0
          %v1740 = vsel %vm1734, %v1669, 0.0
          %v1741 = vsel %vm1734, %v1670, 0.0
          %v1742 = vsel %vm1735, %v1671, 0.0
          %v1743 = vsel %vm1735, %v1672, 0.0
          %v1744 = vsel %vm1732, %v1673, 0.0
          %v1745 = vsel %vm1732, %v1674, 0.0
          %v1746 = vsel %vm1733, %v1675, 0.0
          %v1747 = vsel %vm1733, %v1676, 0.0
          %v1748 = vsel %vm1734, %v1677, 0.0
          %v1749 = vsel %vm1734, %v1678, 0.0
          %v1750 = vsel %vm1735, %v1679, 0.0
          %v1751 = vsel %vm1735, %v1680, 0.0
          %v1752 = vld [vmem:[%s457] sm:$0xff]
          %v1753 = vld [vmem:[%s457 + $0x8] sm:$0xff]
          %v1754 = vadd.f32 %v1736, %v1738
          %v1755 = vadd.f32 %v1737, %v1739
          %v1756 = vadd.f32 %v1754, %v1740
          %v1757 = vadd.f32 %v1755, %v1741
          %v1758 = vadd.f32 %v1756, %v1742
          %v1759 = vadd.f32 %v1757, %v1743
          %v1760 = vadd.f32 %v1752, %v1758
          %v1761 = vadd.f32 %v1753, %v1759
          %1762 = vst [vmem:[%s457] sm:$0xff] %v1760
          %1763 = vst [vmem:[%s457 + $0x8] sm:$0xff] %v1761
          %v1764 = vld [vmem:[%s463] sm:$0xff]
          %v1765 = vld [vmem:[%s463 + $0x8] sm:$0xff]
          %v1766 = vadd.f32 %v1744, %v1746
          %v1767 = vadd.f32 %v1745, %v1747
          %v1768 = vadd.f32 %v1766, %v1748
          %v1769 = vadd.f32 %v1767, %v1749
          %v1770 = vadd.f32 %v1768, %v1750
          %v1771 = vadd.f32 %v1769, %v1751
          %v1772 = vadd.f32 %v1764, %v1770
          %v1773 = vadd.f32 %v1765, %v1771
          %1774 = vst [vmem:[%s463] sm:$0xff] %v1772
          %1775 = vst [vmem:[%s463 + $0x8] sm:$0xff] %v1773
        $region64: #{zinb_loss.1} parent=35 // pred_fallthru
          _
        %s1776 = smul.u32 2, %s30
        %p1777 = scmp.lt.s32.totalorder %s1776, 3
        %s1778 = scalar_select %p1777, %s1776, 3
        %s1779 = smul.addr %s1778, 8
        %s1780 = scalar_lea.vmem %s4, %s1779
        %s1781 = smul.u32 2, %s30
        %p1782 = scmp.lt.s32.totalorder %s1781, 3
        %s1783 = scalar_select %p1782, %s1781, 3
        %s1784 = smul.addr %s1783, 8
        %s1785 = scalar_lea.vmem %s5, %s1784
        // Predicated region
        $region65: #{zinb_loss.1} parent=35 // pred_check
          %p1786 = pneg %p168
        $region66: #{zinb_loss.1} parent=35 // pred_check_branch
          %1788 = sbr.rel (%p1786) target = $region68
        $region67: #{zinb_loss.1} parent=35 // pred_region
          %s1789 = smul.u32 2, %s30
        $region68: #{zinb_loss.1} parent=35 // pred_fallthru
          _
        // Predicated region
        $region69: #{zinb_loss.1} parent=35 // pred_check
          %p1790 = pneg %p194
        $region70: #{zinb_loss.1} parent=35 // pred_check_branch
          %1792 = sbr.rel (%p1790) target = $region72
        $region71: #{zinb_loss.1} parent=35 // pred_region
          %s1793 = smul.u32 2, %s30
        $region72: #{zinb_loss.1} parent=35 // pred_fallthru
          _
      $region36: #{zinb_loss.1} parent=5 // pred_fallthru
        _
      %p1794 = scmp.le.s32.totalorder 2, %s21
      // Predicated region
      $region73: #{zinb_loss.1} parent=5 // pred_check
        %p1795 = pneg %p1794
      $region74: #{zinb_loss.1} parent=5 // pred_check_branch
        %1797 = sbr.rel (%p1795) target = $region76
      $region75: #{zinb_loss.1} parent=5 // pred_region
        %s1798 = ssub.s32 %s21, 2
        // Predicated region
        $region77: #{zinb_loss.1} parent=75 // pred_check
          %p1799 = pneg %p174
        $region78: #{zinb_loss.1} parent=75 // pred_check_branch
          %1801 = sbr.rel (%p1799) target = $region80
        $region79: #{zinb_loss.1} parent=75 // pred_region
          %s1802 = smul.u32 2, %s32
          %p1803 = scmp.lt.s32.totalorder %s1802, 3
          %s1804 = scalar_select %p1803, %s1802, 3
          %s1805 = smul.addr %s1804, 8
          %s1806 = scalar_lea.vmem %s4, %s1805
        $region80: #{zinb_loss.1} parent=75 // pred_fallthru
          _
        // Predicated region
        $region81: #{zinb_loss.1} parent=75 // pred_check
          %p1807 = pneg %p200
        $region82: #{zinb_loss.1} parent=75 // pred_check_branch
          %1809 = sbr.rel (%p1807) target = $region84
        $region83: #{zinb_loss.1} parent=75 // pred_region
          %s1810 = smul.u32 2, %s32
          %p1811 = scmp.lt.s32.totalorder %s1810, 3
          %s1812 = scalar_select %p1811, %s1810, 3
          %s1813 = smul.addr %s1812, 8
          %s1814 = scalar_lea.vmem %s5, %s1813
        $region84: #{zinb_loss.1} parent=75 // pred_fallthru
          _
      $region76: #{zinb_loss.1} parent=5 // pred_fallthru
        _
    $region6: #{zinb_loss.1} parent=1 // loop_footer
      %s25 = sadd.s32 1, %s21
    $region7: #{zinb_loss.1} parent=1 // loop_footer_branch
      %20 = sbr.rel target = $region3
    $region8: #{zinb_loss.1} parent=1 // loop_exit
      _
    %1815 = vsyncpa [#allocation3], 1
    %s1816 = scalar_lea.sflag [#allocation3], 1
    %1817 = vsyncpa %s1816, 1
    %1818 = vsyncpa [#allocation5], 1
    %s1819 = scalar_lea.sflag [#allocation5], 1
    %1820 = vsyncpa %s1819, 1
    %1821 = vsyncpa [#allocation8], 1
    %s1822 = scalar_lea.sflag [#allocation8], 1
    %1823 = vsyncpa %s1822, 1

</llo_original>
